<compile_context>
chip_gen: v7x
topology: tpu7x:2x2x1
jax: 0.10.0
libtpu: 0.0.40
codegen_flags: <defaults>
</compile_context>

<pallas_src>
import jax
import jax.numpy as jnp
from jax.experimental import pallas as pl
from jax.experimental.pallas import tpu as pltpu

HIDDEN = 768
FC1 = 512
FC2 = 256
NUM_CLASSES = 2
PADDED_CLASSES = 128          # lane-dense fc3 / output width
NEG_MASK = -1e30              # padded-class bias -> drops out of log_softmax

# ~0.35us per grid step expressed as an equivalent number of [row x 768] bf16
# HBM rows (~1.1 ns/row on v6e) -- used only by the host-side tile chooser.
_STEP_OVERHEAD_ROWS = 256


def _round_up(x, m):
    return (x + m - 1) // m * m


def _choose_tb(B, block_b):
    """Pick the batch tile TB (multiple of 8).

    Goals (per perf review):
      * large tiles (per-grid-step overhead ~0.35us dominates small tiles;
        >=256 fills the 256-wide MXU M dim on v6e/v7x),
      * minimal batch-padding waste at awkward batch sizes,
      * >=2 (preferably even) grid steps so v7x's two TensorCores both work.
    """
    Bp8 = _round_up(max(B, 1), 8)
    if Bp8 <= 16:
        return Bp8                                    # too small to split
    half = _round_up(pl.cdiv(Bp8, 2), 8)
    if Bp8 <= block_b:
        # Whole batch fits in <=2 tiles: split in two so v7x's second core
        # gets a tile (harmless on single-TC v5e/v6e).
        return min(half, block_b)
    cands = {c for c in (128, 256, 512) if c <= block_b}
    cands.add(block_b)
    if half <= block_b:
        cands.add(half)                               # near-zero padding option
    best = None
    for tb in sorted(cands, reverse=True):
        bp = _round_up(Bp8, tb)
        grid = bp // tb                               # always >=2 here
        cost = bp + grid * _STEP_OVERHEAD_ROWS        # padded DMA rows + step overhead
        score = (cost, grid % 2, -tb)                 # tie-break: even grid, bigger tile
        if best is None or score < best[0]:
            best = (score, tb)
    return best[1]


def _head_kernel(x_ref, w1_ref, b1_ref, w2_ref, b2_ref, w3_ref, b3_ref, o_ref):
    """fc1+relu -> fc2+relu -> fc3 -> log_softmax(dim=1) for one batch tile.

    x arrives already in bf16 (streamed bf16 -> half the dominant HBM read);
    weights are resident bf16; bias adds / ReLU / softmax math stay f32 on the
    VPU/EUP (v5e has no bf16 VALU).  Dropout (p=0.2) is identity in eval mode.
    # TODO(synk): training-mode dropout would need pltpu.prng_seed/prng_random_bits.
    """
    x = x_ref[...]                                           # [TB, 768] bf16 MXU operand

    h1 = jnp.dot(x, w1_ref[...], preferred_element_type=jnp.float32) + b1_ref[...]
    h1 = jnp.maximum(h1, 0.0)                                # ReLU in f32

    h2 = jnp.dot(h1.astype(jnp.bfloat16), w2_ref[...],
                 preferred_element_type=jnp.float32) + b2_ref[...]
    h2 = jnp.maximum(h2, 0.0)                                # ReLU in f32

    logits = jnp.dot(h2.astype(jnp.bfloat16), w3_ref[...],
                     preferred_element_type=jnp.float32) + b3_ref[...]
    # Padded class lanes (>= NUM_CLASSES) carry bias NEG_MASK, so they affect
    # neither the max nor the exp-sum: log_softmax over the 2 real classes is exact.
    m = jnp.max(logits, axis=1, keepdims=True)
    shifted = logits - m
    lse = jnp.log(jnp.sum(jnp.exp(shifted), axis=1, keepdims=True))
    o_ref[...] = shifted - lse                               # [TB, 128] f32, lane-dense


def bert_arch_head(cls_hs, params, *, block_b=512):
    """Classifier head via a batch-gridded Pallas call.

    Weights/biases use constant index_maps + pl.Buffered(1) (single-buffered,
    resident in VMEM for the whole batch); the bf16 activation tile is
    double-buffered by the Pallas pipeline.
    """
    B = cls_hs.shape[0]
    w1, b1, w2, b2, w3p, b3p = params

    if cls_hs.dtype != jnp.bfloat16:
        # Producer should already emit bf16 (see synthetic_bert_cls); this is a
        # cheap fallback so the kernel always streams bf16.
        cls_hs = cls_hs.astype(jnp.bfloat16)

    TB = _choose_tb(B, block_b)
    Bp = _round_up(B, TB)
    if Bp != B:
        cls_hs = jnp.pad(cls_hs, ((0, Bp - B), (0, 0)))

    def resident(shape):
        # Constant block index across the grid -> single buffer is enough.
        return pl.BlockSpec(shape, lambda i: (0, 0), pipeline_mode=pl.Buffered(1))

    out = pl.pallas_call(
        _head_kernel,
        out_shape=jax.ShapeDtypeStruct((Bp, PADDED_CLASSES), jnp.float32),
        grid=(Bp // TB,),
        in_specs=[
            pl.BlockSpec((TB, HIDDEN), lambda i: (i, 0)),    # x tile (bf16, double-buffered)
            resident((HIDDEN, FC1)),                         # w1 (bf16)
            resident((1, FC1)),                              # b1 (f32)
            resident((FC1, FC2)),                            # w2 (bf16)
            resident((1, FC2)),                              # b2 (f32)
            resident((FC2, PADDED_CLASSES)),                 # w3 padded (bf16)
            resident((1, PADDED_CLASSES)),                   # b3 padded (f32)
        ],
        out_specs=pl.BlockSpec((TB, PADDED_CLASSES), lambda i: (i, 0)),
        compiler_params=pltpu.CompilerParams(
            dimension_semantics=("parallel",),               # megacore / v7x 2-TC split
            vmem_limit_bytes=32 * 1024 * 1024,               # safe on v7x 64 MiB VMEM
        ),
    )(cls_hs, w1, b1, w2, b2, w3p, b3p)

    return out[:B, :NUM_CLASSES]   # strip batch padding + padded class lanes


def make_params(key):
    """Deterministic nn.Linear-style init (uniform +-1/sqrt(fan_in)).

    Weights are [in_features, out_features] (transposed vs PyTorch) and cast to
    bf16 for streaming.  Biases stay f32 as [1, out_features].  fc3 is padded
    from 2 -> 128 output lanes: extra weight columns are zero, extra bias lanes
    are NEG_MASK so they vanish from the log_softmax.
    """
    def linear(key, fan_in, fan_out):
        kw, kb = jax.random.split(key)
        bound = 1.0 / jnp.sqrt(fan_in)
        w = jax.random.uniform(kw, (fan_in, fan_out), jnp.float32, -bound, bound)
        b = jax.random.uniform(kb, (1, fan_out), jnp.float32, -bound, bound)
        return w, b

    k1, k2, k3 = jax.random.split(key, 3)
    w1, b1 = linear(k1, HIDDEN, FC1)
    w2, b2 = linear(k2, FC1, FC2)
    w3, b3 = linear(k3, FC2, NUM_CLASSES)

    w3p = jnp.zeros((FC2, PADDED_CLASSES), jnp.float32).at[:, :NUM_CLASSES].set(w3)
    b3p = jnp.full((1, PADDED_CLASSES), NEG_MASK, jnp.float32).at[:, :NUM_CLASSES].set(b3)

    return (w1.astype(jnp.bfloat16), b1,
            w2.astype(jnp.bfloat16), b2,
            w3p.astype(jnp.bfloat16), b3p)


def head_reference(cls_hs, params):
    """Plain-JAX f32 reference for the classifier head (for correctness check)."""
    w1, b1, w2, b2, w3p, b3p = params
    x = cls_hs.astype(jnp.float32)
    h1 = jnp.maximum(x @ w1.astype(jnp.float32) + b1, 0.0)
    h2 = jnp.maximum(h1 @ w2.astype(jnp.float32) + b2, 0.0)
    logits = (h2 @ w3p.astype(jnp.float32) + b3p)[:, :NUM_CLASSES]
    return jax.nn.log_softmax(logits, axis=1)


def synthetic_bert_cls(sent_id, mask, emb_table):
    """Deterministic stand-in for self.bert(sent_id, attention_mask=mask)[0][:, 0].

    Plain-JAX glue (the real BERT encoder is external / untranslatable):
    CLS hidden = embedding(token 0) + mask-weighted mean of token embeddings.
    Emits bf16 so the classifier head streams half the activation bytes.
    # TODO(synk): with a real encoder, fuse this pooling into the head
    # pallas_call so cls_hs never round-trips HBM at all.
    """
    emb = emb_table[sent_id]                                   # [B, S, 768]
    m = mask.astype(jnp.float32)[..., None]                    # [B, S, 1]
    pooled = jnp.sum(emb * m, axis=1) / jnp.maximum(jnp.sum(m, axis=1), 1.0)
    return (emb[:, 0, :] + pooled).astype(jnp.bfloat16)        # [B, 768] bf16


if __name__ == "__main__":
    key = jax.random.PRNGKey(0)
    k_ids, k_emb, k_params = jax.random.split(key, 3)

    B, S, VOCAB = 2, 8, 64
    sent_id = jax.random.randint(k_ids, (B, S), 0, VOCAB, dtype=jnp.int32)
    mask = jnp.ones((B, S), dtype=jnp.int32)

    emb_table = jax.random.normal(k_emb, (VOCAB, HIDDEN), jnp.float32) * 0.02
    params = make_params(k_params)

    cls_hs = synthetic_bert_cls(sent_id, mask, emb_table)      # [B, 768] bf16
    out = bert_arch_head(cls_hs, params)                       # [B, 2] f32 log-probs
    out = jax.block_until_ready(out)

    # sanity 1: shape + log_softmax rows exp-sum to 1
    assert out.shape == (B, NUM_CLASSES)
    row_sums = jnp.exp(out).sum(axis=1)
    assert bool(jnp.all(jnp.abs(row_sums - 1.0) < 1e-5))

    # sanity 2: matches a plain-JAX f32 reference (tolerance covers bf16 matmuls)
    ref = head_reference(cls_hs, params)
    assert bool(jnp.all(jnp.abs(out - ref) < 5e-2))

    print("KERNEL_OK")
</pallas_src>

<mosaic_0001>
module attributes {stable_mosaic.version = 11 : i64} {
  func.func @_head_kernel(%arg0: i32, %arg1: memref<8x768xbf16, #tpu.memory_space<vmem>>, %arg2: memref<768x512xbf16, #tpu.memory_space<vmem>>, %arg3: memref<1x512xf32, #tpu.memory_space<vmem>>, %arg4: memref<512x256xbf16, #tpu.memory_space<vmem>>, %arg5: memref<1x256xf32, #tpu.memory_space<vmem>>, %arg6: memref<256x128xbf16, #tpu.memory_space<vmem>>, %arg7: memref<1x128xf32, #tpu.memory_space<vmem>>, %arg8: memref<8x128xf32, #tpu.memory_space<vmem>>) attributes {dimension_semantics = [#tpu.dimension_semantics<parallel>], iteration_bounds = array<i64: 1>, scalar_prefetch = 0 : i64, scratch_operands = 0 : i64, tpu.core_type = #tpu.core_type<tc>, window_params = [{transform_indices = @transform_0, window_bounds = array<i64: 8, 768>}, {pipeline_mode = #tpu.pipeline_mode<synchronous>, transform_indices = @transform_1, window_bounds = array<i64: 768, 512>}, {pipeline_mode = #tpu.pipeline_mode<synchronous>, transform_indices = @transform_2, window_bounds = array<i64: 1, 512>}, {pipeline_mode = #tpu.pipeline_mode<synchronous>, transform_indices = @transform_3, window_bounds = array<i64: 512, 256>}, {pipeline_mode = #tpu.pipeline_mode<synchronous>, transform_indices = @transform_4, window_bounds = array<i64: 1, 256>}, {pipeline_mode = #tpu.pipeline_mode<synchronous>, transform_indices = @transform_5, window_bounds = array<i64: 256, 128>}, {pipeline_mode = #tpu.pipeline_mode<synchronous>, transform_indices = @transform_6, window_bounds = array<i64: 1, 128>}, {transform_indices = @transform_7, window_bounds = array<i64: 8, 128>}]} {
    %c0 = arith.constant 0 : index
    %c0_0 = arith.constant 0 : index
    %0 = vector.load %arg1[%c0, %c0_0] : memref<8x768xbf16, #tpu.memory_space<vmem>>, vector<8x768xbf16>
    %c0_1 = arith.constant 0 : index
    %c0_2 = arith.constant 0 : index
    %1 = vector.load %arg2[%c0_1, %c0_2] : memref<768x512xbf16, #tpu.memory_space<vmem>>, vector<768x512xbf16>
    %cst = arith.constant dense<0.000000e+00> : vector<8x512xf32>
    %2 = tpu.matmul %0, %1, %cst {dimension_numbers = #tpu.dot_dimension_numbers<[1], [0], [0], [1], [0, 0, 1, 1], [], []>} : vector<8x768xbf16>, vector<768x512xbf16>, vector<8x512xf32> -> vector<8x512xf32>
    %c0_3 = arith.constant 0 : index
    %c0_4 = arith.constant 0 : index
    %3 = vector.load %arg3[%c0_3, %c0_4] : memref<1x512xf32, #tpu.memory_space<vmem>>, vector<1x512xf32>
    %4 = vector.broadcast %3 : vector<1x512xf32> to vector<8x512xf32>
    %5 = arith.addf %2, %4 : vector<8x512xf32>
    %cst_5 = arith.constant 0.000000e+00 : f32
    %6 = vector.broadcast %cst_5 : f32 to vector<8x512xf32>
    %7 = arith.maximumf %5, %6 : vector<8x512xf32>
    %8 = arith.truncf %7 : vector<8x512xf32> to vector<8x512xbf16>
    %c0_6 = arith.constant 0 : index
    %c0_7 = arith.constant 0 : index
    %9 = vector.load %arg4[%c0_6, %c0_7] : memref<512x256xbf16, #tpu.memory_space<vmem>>, vector<512x256xbf16>
    %cst_8 = arith.constant dense<0.000000e+00> : vector<8x256xf32>
    %10 = tpu.matmul %8, %9, %cst_8 {dimension_numbers = #tpu.dot_dimension_numbers<[1], [0], [0], [1], [0, 0, 1, 1], [], []>} : vector<8x512xbf16>, vector<512x256xbf16>, vector<8x256xf32> -> vector<8x256xf32>
    %c0_9 = arith.constant 0 : index
    %c0_10 = arith.constant 0 : index
    %11 = vector.load %arg5[%c0_9, %c0_10] : memref<1x256xf32, #tpu.memory_space<vmem>>, vector<1x256xf32>
    %12 = vector.broadcast %11 : vector<1x256xf32> to vector<8x256xf32>
    %13 = arith.addf %10, %12 : vector<8x256xf32>
    %cst_11 = arith.constant 0.000000e+00 : f32
    %14 = vector.broadcast %cst_11 : f32 to vector<8x256xf32>
    %15 = arith.maximumf %13, %14 : vector<8x256xf32>
    %16 = arith.truncf %15 : vector<8x256xf32> to vector<8x256xbf16>
    %c0_12 = arith.constant 0 : index
    %c0_13 = arith.constant 0 : index
    %17 = vector.load %arg6[%c0_12, %c0_13] : memref<256x128xbf16, #tpu.memory_space<vmem>>, vector<256x128xbf16>
    %cst_14 = arith.constant dense<0.000000e+00> : vector<8x128xf32>
    %18 = tpu.matmul %16, %17, %cst_14 {dimension_numbers = #tpu.dot_dimension_numbers<[1], [0], [0], [1], [0, 0, 1, 1], [], []>} : vector<8x256xbf16>, vector<256x128xbf16>, vector<8x128xf32> -> vector<8x128xf32>
    %c0_15 = arith.constant 0 : index
    %c0_16 = arith.constant 0 : index
    %19 = vector.load %arg7[%c0_15, %c0_16] : memref<1x128xf32, #tpu.memory_space<vmem>>, vector<1x128xf32>
    %20 = vector.broadcast %19 : vector<1x128xf32> to vector<8x128xf32>
    %21 = arith.addf %18, %20 : vector<8x128xf32>
    %cst_17 = arith.constant dense<0xFF800000> : vector<8xf32>
    %22 = vector.multi_reduction <maximumf>, %21, %cst_17 [1] : vector<8x128xf32> to vector<8xf32>
    %23 = vector.shape_cast %22 : vector<8xf32> to vector<8x1xf32>
    %24 = vector.broadcast %23 : vector<8x1xf32> to vector<8x128xf32>
    %25 = arith.subf %21, %24 : vector<8x128xf32>
    %26 = math.exp %25 : vector<8x128xf32>
    %cst_18 = arith.constant dense<0.000000e+00> : vector<8xf32>
    %27 = vector.multi_reduction <add>, %26, %cst_18 [1] : vector<8x128xf32> to vector<8xf32>
    %28 = vector.shape_cast %27 : vector<8xf32> to vector<8x1xf32>
    %29 = math.log %28 : vector<8x1xf32>
    %30 = vector.broadcast %29 : vector<8x1xf32> to vector<8x128xf32>
    %31 = arith.subf %25, %30 : vector<8x128xf32>
    %c0_19 = arith.constant 0 : index
    %c0_20 = arith.constant 0 : index
    %32 = vector.load %arg8[%c0_19, %c0_20] : memref<8x128xf32, #tpu.memory_space<vmem>>, vector<8x128xf32>
    tpu.vector_store %arg8[%c0_19, %c0_20], %31 {strides = array<i32>} : memref<8x128xf32, #tpu.memory_space<vmem>>, vector<8x128xf32>,
    return
  }
  func.func @transform_0(%arg0: i32) -> (i32, i32) {
    %c0_i32 = arith.constant 0 : i32
    %c0_i32_0 = arith.constant 0 : i32
    return %arg0, %c0_i32 : i32, i32
  }
  func.func @transform_1(%arg0: i32) -> (i32, i32) {
    %c0_i32 = arith.constant 0 : i32
    %c0_i32_0 = arith.constant 0 : i32
    %c0_i32_1 = arith.constant 0 : i32
    return %c0_i32, %c0_i32_0 : i32, i32
  }
  func.func @transform_2(%arg0: i32) -> (i32, i32) {
    %c0_i32 = arith.constant 0 : i32
    %c0_i32_0 = arith.constant 0 : i32
    %c0_i32_1 = arith.constant 0 : i32
    return %c0_i32, %c0_i32_0 : i32, i32
  }
  func.func @transform_3(%arg0: i32) -> (i32, i32) {
    %c0_i32 = arith.constant 0 : i32
    %c0_i32_0 = arith.constant 0 : i32
    %c0_i32_1 = arith.constant 0 : i32
    return %c0_i32, %c0_i32_0 : i32, i32
  }
  func.func @transform_4(%arg0: i32) -> (i32, i32) {
    %c0_i32 = arith.constant 0 : i32
    %c0_i32_0 = arith.constant 0 : i32
    %c0_i32_1 = arith.constant 0 : i32
    return %c0_i32, %c0_i32_0 : i32, i32
  }
  func.func @transform_5(%arg0: i32) -> (i32, i32) {
    %c0_i32 = arith.constant 0 : i32
    %c0_i32_0 = arith.constant 0 : i32
    %c0_i32_1 = arith.constant 0 : i32
    return %c0_i32, %c0_i32_0 : i32, i32
  }
  func.func @transform_6(%arg0: i32) -> (i32, i32) {
    %c0_i32 = arith.constant 0 : i32
    %c0_i32_0 = arith.constant 0 : i32
    %c0_i32_1 = arith.constant 0 : i32
    return %c0_i32, %c0_i32_0 : i32, i32
  }
  func.func @transform_7(%arg0: i32) -> (i32, i32) {
    %c0_i32 = arith.constant 0 : i32
    %c0_i32_0 = arith.constant 0 : i32
    return %arg0, %c0_i32 : i32, i32
  }
}

</mosaic_0001>

<llo_original>
// kernel: tpu_custom_call.1
$region0: #{tpu_custom_call.1}
  #allocation0 [shape = 'u32[]', space=smem, size = 0x4, offset = 0x4, fixed_abs, tag = 'smem constant byte address 0x4 - core index']
  #allocation1 [shape = 'u32[144,128]{1,0:T(1,128)}', space=vmem, size = 0x12000, scoped, tag = 'internal scratch']
  %s0 = inlined_call_operand.hbm [shape: bf16[8,768], index: 0, kind: input, shape index: {}]
  %s1 = inlined_call_operand.hbm [shape: bf16[768,512], index: 1, kind: input, shape index: {}]
  %s2 = inlined_call_operand.vmem [shape: f32[1,512], index: 2, kind: input, shape index: {}]
  %s3 = inlined_call_operand.hbm [shape: bf16[512,256], index: 3, kind: input, shape index: {}]
  %s4 = inlined_call_operand.vmem [shape: f32[1,256], index: 4, kind: input, shape index: {}]
  %s5 = inlined_call_operand.hbm [shape: bf16[256,128], index: 5, kind: input, shape index: {}]
  %s6 = inlined_call_operand.vmem [shape: f32[1,128], index: 6, kind: input, shape index: {}]
  %s7 = inlined_call_operand.hbm [shape: f32[8,128], index: 7, kind: output, shape index: {}]
  %s8 = sld [smem:[#allocation0]]
  $region54: #{tpu_custom_call.1} parent=0
    _
  %s10 = ssub.s32 1, %s8
  %s11 = scalar_select 0, %s10, %s8
  $region1: #{tpu_custom_call.1} parent=0
    #allocation2 [shape = 'u8[12288]{0}', space=vmem, size = 0x3000, scoped, tag = 'input window, operand 0, single buffered']
    #allocation3 [shape = 's32[1]{0}', space=sflag, size = 0x4, scoped, tag = 'scoped memory for tpu_custom_call.1']
    #allocation4 [shape = 's32[1]{0}', space=sflag, size = 0x4, scoped, tag = 'scoped memory for tpu_custom_call.1']
    #allocation5 [shape = 'u8[786432]{0}', space=vmem, size = 0xc0000, scoped, tag = 'input window, operand 1, single buffered']
    #allocation6 [shape = 's32[1]{0}', space=sflag, size = 0x4, scoped, tag = 'scoped memory for tpu_custom_call.1']
    #allocation7 [shape = 'u8[262144]{0}', space=vmem, size = 0x40000, scoped, tag = 'input window, operand 3, single buffered']
    #allocation8 [shape = 'u8[65536]{0}', space=vmem, size = 0x10000, scoped, tag = 'input window, operand 5, single buffered']
    #allocation9 [shape = 's32[1]{0}', space=sflag, size = 0x4, scoped, tag = 'scoped memory for tpu_custom_call.1']
    #allocation10 [shape = 'u8[4096]{0}', space=vmem, size = 0x1000, scoped, tag = 'output window, operand 0, single buffered']
    %12 = vsyncpa [#allocation3], 0
    %13 = vsyncpa [#allocation6], 0
    %14 = vsyncpa [#allocation9], 0
    %15 = vsyncpa [#allocation4], 0
    // Predicated region
    $region2: #{tpu_custom_call.1} parent=1 // pred_check
      _
    $region3: #{tpu_custom_call.1} parent=1 // pred_check_branch
      %17 = sbr.rel (0) target = $region5
    $region4: #{tpu_custom_call.1} parent=1 // pred_region
      %s19 = ssub.s32 384, 384
      %20 = vsyncadd [#allocation3], %s19
      %s22 = sshll.u32 [#allocation2], 4
      %s23 = int_to_ptr.vmem [resolvable:$true] %s22
      %25 = dma.hbm_to_vmem [thread:$0]  %s0, 384, %s23, [#allocation3]
    $region5: #{tpu_custom_call.1} parent=1 // pred_fallthru
      _
    // Predicated region
    $region6: #{tpu_custom_call.1} parent=1 // pred_check
      _
    $region7: #{tpu_custom_call.1} parent=1 // pred_check_branch
      %27 = sbr.rel (0) target = $region9
    $region8: #{tpu_custom_call.1} parent=1 // pred_region
      %s29 = ssub.s32 24576, 24576
      %30 = vsyncadd [#allocation6], %s29
      %s31 = sshll.u32 [#allocation5], 4
      %s32 = int_to_ptr.vmem [resolvable:$true] %s31
      %37 = dma.hbm_to_vmem [thread:$0]  %s1, 24576, %s32, [#allocation6], 256, 256, 16
    $region9: #{tpu_custom_call.1} parent=1 // pred_fallthru
      _
    // Predicated region
    $region10: #{tpu_custom_call.1} parent=1 // pred_check
      _
    $region11: #{tpu_custom_call.1} parent=1 // pred_check_branch
      %39 = sbr.rel (0) target = $region13
    $region12: #{tpu_custom_call.1} parent=1 // pred_region
      _
    $region13: #{tpu_custom_call.1} parent=1 // pred_fallthru
      _
    // Predicated region
    $region14: #{tpu_custom_call.1} parent=1 // pred_check
      _
    $region15: #{tpu_custom_call.1} parent=1 // pred_check_branch
      %41 = sbr.rel (0) target = $region17
    $region16: #{tpu_custom_call.1} parent=1 // pred_region
      %s43 = ssub.s32 8192, 8192
      %44 = vsyncadd [#allocation6], %s43
      %s45 = sshll.u32 [#allocation7], 4
      %s46 = int_to_ptr.vmem [resolvable:$true] %s45
      %51 = dma.hbm_to_vmem [thread:$0]  %s3, 8192, %s46, [#allocation6], 128, 128, 8
    $region17: #{tpu_custom_call.1} parent=1 // pred_fallthru
      _
    // Predicated region
    $region18: #{tpu_custom_call.1} parent=1 // pred_check
      _
    $region19: #{tpu_custom_call.1} parent=1 // pred_check_branch
      %53 = sbr.rel (0) target = $region21
    $region20: #{tpu_custom_call.1} parent=1 // pred_region
      _
    $region21: #{tpu_custom_call.1} parent=1 // pred_fallthru
      _
    // Predicated region
    $region22: #{tpu_custom_call.1} parent=1 // pred_check
      _
    $region23: #{tpu_custom_call.1} parent=1 // pred_check_branch
      %55 = sbr.rel (0) target = $region25
    $region24: #{tpu_custom_call.1} parent=1 // pred_region
      %s57 = ssub.s32 2048, 2048
      %58 = vsyncadd [#allocation9], %s57
      %s59 = sshll.u32 [#allocation8], 4
      %s60 = int_to_ptr.vmem [resolvable:$true] %s59
      %65 = dma.hbm_to_vmem [thread:$0]  %s5, 2048, %s60, [#allocation9], 64, 64, 4
    $region25: #{tpu_custom_call.1} parent=1 // pred_fallthru
      _
    // Predicated region
    $region26: #{tpu_custom_call.1} parent=1 // pred_check
      _
    $region27: #{tpu_custom_call.1} parent=1 // pred_check_branch
      %67 = sbr.rel (0) target = $region29
    $region28: #{tpu_custom_call.1} parent=1 // pred_region
      _
    $region29: #{tpu_custom_call.1} parent=1 // pred_fallthru
      _
    // Predicated region
    $region30: #{tpu_custom_call.1} parent=1 // pred_check
      _
    $region31: #{tpu_custom_call.1} parent=1 // pred_check_branch
      %69 = sbr.rel (0) target = $region33
    $region32: #{tpu_custom_call.1} parent=1 // pred_region
      %70 = dma.done [#allocation3], 384
    $region33: #{tpu_custom_call.1} parent=1 // pred_fallthru
      _
    // Predicated region
    $region34: #{tpu_custom_call.1} parent=1 // pred_check
      _
    $region35: #{tpu_custom_call.1} parent=1 // pred_check_branch
      %72 = sbr.rel (0) target = $region37
    $region36: #{tpu_custom_call.1} parent=1 // pred_region
      %73 = dma.done [#allocation6], 24576
    $region37: #{tpu_custom_call.1} parent=1 // pred_fallthru
      _
    // Predicated region
    $region38: #{tpu_custom_call.1} parent=1 // pred_check
      _
    $region39: #{tpu_custom_call.1} parent=1 // pred_check_branch
      %75 = sbr.rel (0) target = $region41
    $region40: #{tpu_custom_call.1} parent=1 // pred_region
      %76 = dma.done [#allocation6], 8192
    $region41: #{tpu_custom_call.1} parent=1 // pred_fallthru
      _
    // Predicated region
    $region42: #{tpu_custom_call.1} parent=1 // pred_check
      _
    $region43: #{tpu_custom_call.1} parent=1 // pred_check_branch
      %78 = sbr.rel (0) target = $region45
    $region44: #{tpu_custom_call.1} parent=1 // pred_region
      %79 = dma.done [#allocation9], 2048
    $region45: #{tpu_custom_call.1} parent=1 // pred_fallthru
      _
    %v81 = vld [vmem:[#allocation2] sm:$0xff]
    %v82 = vld [vmem:[#allocation2 + $0x8] sm:$0xff]
    %v83 = vld [vmem:[#allocation2 + $0x10] sm:$0xff]
    %v84 = vld [vmem:[#allocation5] sm:$0xff]
    %v85 = vld [vmem:[#allocation5 + $0x8] sm:$0xff]
    %v86 = vld [vmem:[#allocation5 + $0x10] sm:$0xff]
    %v87 = vld [vmem:[#allocation5 + $0x18] sm:$0xff]
    %v88 = vld [vmem:[#allocation5 + $0x20] sm:$0xff]
    %v89 = vld [vmem:[#allocation5 + $0x28] sm:$0xff]
    %v90 = vld [vmem:[#allocation5 + $0x30] sm:$0xff]
    %v91 = vld [vmem:[#allocation5 + $0x38] sm:$0xff]
    %v92 = vld [vmem:[#allocation5 + $0x40] sm:$0xff]
    %v93 = vld [vmem:[#allocation5 + $0x48] sm:$0xff]
    %v94 = vld [vmem:[#allocation5 + $0x50] sm:$0xff]
    %v95 = vld [vmem:[#allocation5 + $0x58] sm:$0xff]
    %v96 = vld [vmem:[#allocation5 + $0x60] sm:$0xff]
    %v97 = vld [vmem:[#allocation5 + $0x68] sm:$0xff]
    %v98 = vld [vmem:[#allocation5 + $0x70] sm:$0xff]
    %v99 = vld [vmem:[#allocation5 + $0x78] sm:$0xff]
    %v100 = vld [vmem:[#allocation5 + $0x80] sm:$0xff]
    %v101 = vld [vmem:[#allocation5 + $0x88] sm:$0xff]
    %v102 = vld [vmem:[#allocation5 + $0x90] sm:$0xff]
    %v103 = vld [vmem:[#allocation5 + $0x98] sm:$0xff]
    %v104 = vld [vmem:[#allocation5 + $0xa0] sm:$0xff]
    %v105 = vld [vmem:[#allocation5 + $0xa8] sm:$0xff]
    %v106 = vld [vmem:[#allocation5 + $0xb0] sm:$0xff]
    %v107 = vld [vmem:[#allocation5 + $0xb8] sm:$0xff]
    %v108 = vld [vmem:[#allocation5 + $0xc0] sm:$0xff]
    %v109 = vld [vmem:[#allocation5 + $0xc8] sm:$0xff]
    %v110 = vld [vmem:[#allocation5 + $0xd0] sm:$0xff]
    %v111 = vld [vmem:[#allocation5 + $0xd8] sm:$0xff]
    %v112 = vld [vmem:[#allocation5 + $0xe0] sm:$0xff]
    %v113 = vld [vmem:[#allocation5 + $0xe8] sm:$0xff]
    %v114 = vld [vmem:[#allocation5 + $0xf0] sm:$0xff]
    %v115 = vld [vmem:[#allocation5 + $0xf8] sm:$0xff]
    %v116 = vld [vmem:[#allocation5 + $0x100] sm:$0xff]
    %v117 = vld [vmem:[#allocation5 + $0x108] sm:$0xff]
    %v118 = vld [vmem:[#allocation5 + $0x110] sm:$0xff]
    %v119 = vld [vmem:[#allocation5 + $0x118] sm:$0xff]
    %v120 = vld [vmem:[#allocation5 + $0x120] sm:$0xff]
    %v121 = vld [vmem:[#allocation5 + $0x128] sm:$0xff]
    %v122 = vld [vmem:[#allocation5 + $0x130] sm:$0xff]
    %v123 = vld [vmem:[#allocation5 + $0x138] sm:$0xff]
    %v124 = vld [vmem:[#allocation5 + $0x140] sm:$0xff]
    %v125 = vld [vmem:[#allocation5 + $0x148] sm:$0xff]
    %v126 = vld [vmem:[#allocation5 + $0x150] sm:$0xff]
    %v127 = vld [vmem:[#allocation5 + $0x158] sm:$0xff]
    %v128 = vld [vmem:[#allocation5 + $0x160] sm:$0xff]
    %v129 = vld [vmem:[#allocation5 + $0x168] sm:$0xff]
    %v130 = vld [vmem:[#allocation5 + $0x170] sm:$0xff]
    %v131 = vld [vmem:[#allocation5 + $0x178] sm:$0xff]
    %v132 = vld [vmem:[#allocation5 + $0x180] sm:$0xff]
    %v133 = vld [vmem:[#allocation5 + $0x188] sm:$0xff]
    %v134 = vld [vmem:[#allocation5 + $0x190] sm:$0xff]
    %v135 = vld [vmem:[#allocation5 + $0x198] sm:$0xff]
    %v136 = vld [vmem:[#allocation5 + $0x1a0] sm:$0xff]
    %v137 = vld [vmem:[#allocation5 + $0x1a8] sm:$0xff]
    %v138 = vld [vmem:[#allocation5 + $0x1b0] sm:$0xff]
    %v139 = vld [vmem:[#allocation5 + $0x1b8] sm:$0xff]
    %v140 = vld [vmem:[#allocation5 + $0x1c0] sm:$0xff]
    %v141 = vld [vmem:[#allocation5 + $0x1c8] sm:$0xff]
    %v142 = vld [vmem:[#allocation5 + $0x1d0] sm:$0xff]
    %v143 = vld [vmem:[#allocation5 + $0x1d8] sm:$0xff]
    %v144 = vld [vmem:[#allocation5 + $0x1e0] sm:$0xff]
    %v145 = vld [vmem:[#allocation5 + $0x1e8] sm:$0xff]
    %v146 = vld [vmem:[#allocation5 + $0x1f0] sm:$0xff]
    %v147 = vld [vmem:[#allocation5 + $0x1f8] sm:$0xff]
    %v148 = vld [vmem:[#allocation5 + $0x200] sm:$0xff]
    %v149 = vld [vmem:[#allocation5 + $0x208] sm:$0xff]
    %v150 = vld [vmem:[#allocation5 + $0x210] sm:$0xff]
    %v151 = vld [vmem:[#allocation5 + $0x218] sm:$0xff]
    %v152 = vld [vmem:[#allocation5 + $0x220] sm:$0xff]
    %v153 = vld [vmem:[#allocation5 + $0x228] sm:$0xff]
    %v154 = vld [vmem:[#allocation5 + $0x230] sm:$0xff]
    %v155 = vld [vmem:[#allocation5 + $0x238] sm:$0xff]
    %v156 = vld [vmem:[#allocation5 + $0x240] sm:$0xff]
    %v157 = vld [vmem:[#allocation5 + $0x248] sm:$0xff]
    %v158 = vld [vmem:[#allocation5 + $0x250] sm:$0xff]
    %v159 = vld [vmem:[#allocation5 + $0x258] sm:$0xff]
    %v160 = vld [vmem:[#allocation5 + $0x260] sm:$0xff]
    %v161 = vld [vmem:[#allocation5 + $0x268] sm:$0xff]
    %v162 = vld [vmem:[#allocation5 + $0x270] sm:$0xff]
    %v163 = vld [vmem:[#allocation5 + $0x278] sm:$0xff]
    %v164 = vld [vmem:[#allocation5 + $0x280] sm:$0xff]
    %v165 = vld [vmem:[#allocation5 + $0x288] sm:$0xff]
    %v166 = vld [vmem:[#allocation5 + $0x290] sm:$0xff]
    %v167 = vld [vmem:[#allocation5 + $0x298] sm:$0xff]
    %v168 = vld [vmem:[#allocation5 + $0x2a0] sm:$0xff]
    %v169 = vld [vmem:[#allocation5 + $0x2a8] sm:$0xff]
    %v170 = vld [vmem:[#allocation5 + $0x2b0] sm:$0xff]
    %v171 = vld [vmem:[#allocation5 + $0x2b8] sm:$0xff]
    %v172 = vld [vmem:[#allocation5 + $0x2c0] sm:$0xff]
    %v173 = vld [vmem:[#allocation5 + $0x2c8] sm:$0xff]
    %v174 = vld [vmem:[#allocation5 + $0x2d0] sm:$0xff]
    %v175 = vld [vmem:[#allocation5 + $0x2d8] sm:$0xff]
    %v176 = vld [vmem:[#allocation5 + $0x2e0] sm:$0xff]
    %v177 = vld [vmem:[#allocation5 + $0x2e8] sm:$0xff]
    %v178 = vld [vmem:[#allocation5 + $0x2f0] sm:$0xff]
    %v179 = vld [vmem:[#allocation5 + $0x2f8] sm:$0xff]
    %v180 = vld [vmem:[#allocation5 + $0x300] sm:$0xff]
    %v181 = vld [vmem:[#allocation5 + $0x308] sm:$0xff]
    %v182 = vld [vmem:[#allocation5 + $0x310] sm:$0xff]
    %v183 = vld [vmem:[#allocation5 + $0x318] sm:$0xff]
    %v184 = vld [vmem:[#allocation5 + $0x320] sm:$0xff]
    %v185 = vld [vmem:[#allocation5 + $0x328] sm:$0xff]
    %v186 = vld [vmem:[#allocation5 + $0x330] sm:$0xff]
    %v187 = vld [vmem:[#allocation5 + $0x338] sm:$0xff]
    %v188 = vld [vmem:[#allocation5 + $0x340] sm:$0xff]
    %v189 = vld [vmem:[#allocation5 + $0x348] sm:$0xff]
    %v190 = vld [vmem:[#allocation5 + $0x350] sm:$0xff]
    %v191 = vld [vmem:[#allocation5 + $0x358] sm:$0xff]
    %v192 = vld [vmem:[#allocation5 + $0x360] sm:$0xff]
    %v193 = vld [vmem:[#allocation5 + $0x368] sm:$0xff]
    %v194 = vld [vmem:[#allocation5 + $0x370] sm:$0xff]
    %v195 = vld [vmem:[#allocation5 + $0x378] sm:$0xff]
    %v196 = vld [vmem:[#allocation5 + $0x380] sm:$0xff]
    %v197 = vld [vmem:[#allocation5 + $0x388] sm:$0xff]
    %v198 = vld [vmem:[#allocation5 + $0x390] sm:$0xff]
    %v199 = vld [vmem:[#allocation5 + $0x398] sm:$0xff]
    %v200 = vld [vmem:[#allocation5 + $0x3a0] sm:$0xff]
    %v201 = vld [vmem:[#allocation5 + $0x3a8] sm:$0xff]
    %v202 = vld [vmem:[#allocation5 + $0x3b0] sm:$0xff]
    %v203 = vld [vmem:[#allocation5 + $0x3b8] sm:$0xff]
    %v204 = vld [vmem:[#allocation5 + $0x3c0] sm:$0xff]
    %v205 = vld [vmem:[#allocation5 + $0x3c8] sm:$0xff]
    %v206 = vld [vmem:[#allocation5 + $0x3d0] sm:$0xff]
    %v207 = vld [vmem:[#allocation5 + $0x3d8] sm:$0xff]
    %v208 = vld [vmem:[#allocation5 + $0x3e0] sm:$0xff]
    %v209 = vld [vmem:[#allocation5 + $0x3e8] sm:$0xff]
    %v210 = vld [vmem:[#allocation5 + $0x3f0] sm:$0xff]
    %v211 = vld [vmem:[#allocation5 + $0x3f8] sm:$0xff]
    %v212 = vld [vmem:[#allocation5 + $0x400] sm:$0xff]
    %v213 = vld [vmem:[#allocation5 + $0x408] sm:$0xff]
    %v214 = vld [vmem:[#allocation5 + $0x410] sm:$0xff]
    %v215 = vld [vmem:[#allocation5 + $0x418] sm:$0xff]
    %v216 = vld [vmem:[#allocation5 + $0x420] sm:$0xff]
    %v217 = vld [vmem:[#allocation5 + $0x428] sm:$0xff]
    %v218 = vld [vmem:[#allocation5 + $0x430] sm:$0xff]
    %v219 = vld [vmem:[#allocation5 + $0x438] sm:$0xff]
    %v220 = vld [vmem:[#allocation5 + $0x440] sm:$0xff]
    %v221 = vld [vmem:[#allocation5 + $0x448] sm:$0xff]
    %v222 = vld [vmem:[#allocation5 + $0x450] sm:$0xff]
    %v223 = vld [vmem:[#allocation5 + $0x458] sm:$0xff]
    %v224 = vld [vmem:[#allocation5 + $0x460] sm:$0xff]
    %v225 = vld [vmem:[#allocation5 + $0x468] sm:$0xff]
    %v226 = vld [vmem:[#allocation5 + $0x470] sm:$0xff]
    %v227 = vld [vmem:[#allocation5 + $0x478] sm:$0xff]
    %v228 = vld [vmem:[#allocation5 + $0x480] sm:$0xff]
    %v229 = vld [vmem:[#allocation5 + $0x488] sm:$0xff]
    %v230 = vld [vmem:[#allocation5 + $0x490] sm:$0xff]
    %v231 = vld [vmem:[#allocation5 + $0x498] sm:$0xff]
    %v232 = vld [vmem:[#allocation5 + $0x4a0] sm:$0xff]
    %v233 = vld [vmem:[#allocation5 + $0x4a8] sm:$0xff]
    %v234 = vld [vmem:[#allocation5 + $0x4b0] sm:$0xff]
    %v235 = vld [vmem:[#allocation5 + $0x4b8] sm:$0xff]
    %v236 = vld [vmem:[#allocation5 + $0x4c0] sm:$0xff]
    %v237 = vld [vmem:[#allocation5 + $0x4c8] sm:$0xff]
    %v238 = vld [vmem:[#allocation5 + $0x4d0] sm:$0xff]
    %v239 = vld [vmem:[#allocation5 + $0x4d8] sm:$0xff]
    %v240 = vld [vmem:[#allocation5 + $0x4e0] sm:$0xff]
    %v241 = vld [vmem:[#allocation5 + $0x4e8] sm:$0xff]
    %v242 = vld [vmem:[#allocation5 + $0x4f0] sm:$0xff]
    %v243 = vld [vmem:[#allocation5 + $0x4f8] sm:$0xff]
    %v244 = vld [vmem:[#allocation5 + $0x500] sm:$0xff]
    %v245 = vld [vmem:[#allocation5 + $0x508] sm:$0xff]
    %v246 = vld [vmem:[#allocation5 + $0x510] sm:$0xff]
    %v247 = vld [vmem:[#allocation5 + $0x518] sm:$0xff]
    %v248 = vld [vmem:[#allocation5 + $0x520] sm:$0xff]
    %v249 = vld [vmem:[#allocation5 + $0x528] sm:$0xff]
    %v250 = vld [vmem:[#allocation5 + $0x530] sm:$0xff]
    %v251 = vld [vmem:[#allocation5 + $0x538] sm:$0xff]
    %v252 = vld [vmem:[#allocation5 + $0x540] sm:$0xff]
    %v253 = vld [vmem:[#allocation5 + $0x548] sm:$0xff]
    %v254 = vld [vmem:[#allocation5 + $0x550] sm:$0xff]
    %v255 = vld [vmem:[#allocation5 + $0x558] sm:$0xff]
    %v256 = vld [vmem:[#allocation5 + $0x560] sm:$0xff]
    %v257 = vld [vmem:[#allocation5 + $0x568] sm:$0xff]
    %v258 = vld [vmem:[#allocation5 + $0x570] sm:$0xff]
    %v259 = vld [vmem:[#allocation5 + $0x578] sm:$0xff]
    %v260 = vld [vmem:[#allocation5 + $0x580] sm:$0xff]
    %v261 = vld [vmem:[#allocation5 + $0x588] sm:$0xff]
    %v262 = vld [vmem:[#allocation5 + $0x590] sm:$0xff]
    %v263 = vld [vmem:[#allocation5 + $0x598] sm:$0xff]
    %v264 = vld [vmem:[#allocation5 + $0x5a0] sm:$0xff]
    %v265 = vld [vmem:[#allocation5 + $0x5a8] sm:$0xff]
    %v266 = vld [vmem:[#allocation5 + $0x5b0] sm:$0xff]
    %v267 = vld [vmem:[#allocation5 + $0x5b8] sm:$0xff]
    %v268 = vld [vmem:[#allocation5 + $0x5c0] sm:$0xff]
    %v269 = vld [vmem:[#allocation5 + $0x5c8] sm:$0xff]
    %v270 = vld [vmem:[#allocation5 + $0x5d0] sm:$0xff]
    %v271 = vld [vmem:[#allocation5 + $0x5d8] sm:$0xff]
    %v272 = vld [vmem:[#allocation5 + $0x5e0] sm:$0xff]
    %v273 = vld [vmem:[#allocation5 + $0x5e8] sm:$0xff]
    %v274 = vld [vmem:[#allocation5 + $0x5f0] sm:$0xff]
    %v275 = vld [vmem:[#allocation5 + $0x5f8] sm:$0xff]
    %v276 = vld [vmem:[%s2] sm:$0xf]
    %v278 = vlaneseq
    %v279 = vshrl.u32 %v278, 7
    %v280 = vsub.s32 0, %v279
    %v281 = vrot.slane %v276, %v280
    %v282 = vlaneseq
    %v283 = vshrl.u32 %v282, 7
    %v284 = vsub.s32 1, %v283
    %v285 = vrot.slane %v276, %v284
    %v286 = vlaneseq
    %v287 = vshrl.u32 %v286, 7
    %v288 = vsub.s32 2, %v287
    %v289 = vrot.slane %v276, %v288
    %v290 = vlaneseq
    %v291 = vshrl.u32 %v290, 7
    %v292 = vsub.s32 3, %v291
    %v293 = vrot.slane %v276, %v292
    %v301 = vunpack.c.l.b16 %v81
    %v302 = vunpack.c.h.b16 %v81
    %v303 = vunpack.c.l.b16 %v82
    %v304 = vunpack.c.h.b16 %v82
    %v305 = vunpack.c.l.b16 %v83
    %v306 = vunpack.c.h.b16 %v83
    %v307 = vpack.c.b16 %v301, %v301
    %v308 = vpack.c.b16 %v302, %v302
    %v309 = vpack.c.b16 %v303, %v303
    %v310 = vpack.c.b16 %v304, %v304
    %v311 = vpack.c.b16 %v305, %v305
    %v312 = vpack.c.b16 %v306, %v306
    %v511 = vunpack.c.l.b16 %v84
    %v512 = vunpack.c.h.b16 %v84
    %v513 = vunpack.c.l.b16 %v85
    %v514 = vunpack.c.h.b16 %v85
    %v515 = vunpack.c.l.b16 %v86
    %v516 = vunpack.c.h.b16 %v86
    %v517 = vunpack.c.l.b16 %v87
    %v518 = vunpack.c.h.b16 %v87
    %v519 = vunpack.c.l.b16 %v88
    %v520 = vunpack.c.h.b16 %v88
    %v521 = vunpack.c.l.b16 %v89
    %v522 = vunpack.c.h.b16 %v89
    %v523 = vunpack.c.l.b16 %v90
    %v524 = vunpack.c.h.b16 %v90
    %v525 = vunpack.c.l.b16 %v91
    %v526 = vunpack.c.h.b16 %v91
    %v527 = vunpack.c.l.b16 %v92
    %v528 = vunpack.c.h.b16 %v92
    %v529 = vunpack.c.l.b16 %v93
    %v530 = vunpack.c.h.b16 %v93
    %v531 = vunpack.c.l.b16 %v94
    %v532 = vunpack.c.h.b16 %v94
    %v533 = vunpack.c.l.b16 %v95
    %v534 = vunpack.c.h.b16 %v95
    %v535 = vunpack.c.l.b16 %v96
    %v536 = vunpack.c.h.b16 %v96
    %v537 = vunpack.c.l.b16 %v97
    %v538 = vunpack.c.h.b16 %v97
    %v539 = vunpack.c.l.b16 %v98
    %v540 = vunpack.c.h.b16 %v98
    %v541 = vunpack.c.l.b16 %v99
    %v542 = vunpack.c.h.b16 %v99
    %v543 = vunpack.c.l.b16 %v100
    %v544 = vunpack.c.h.b16 %v100
    %v545 = vunpack.c.l.b16 %v101
    %v546 = vunpack.c.h.b16 %v101
    %v547 = vunpack.c.l.b16 %v102
    %v548 = vunpack.c.h.b16 %v102
    %v549 = vunpack.c.l.b16 %v103
    %v550 = vunpack.c.h.b16 %v103
    %v551 = vunpack.c.l.b16 %v104
    %v552 = vunpack.c.h.b16 %v104
    %v553 = vunpack.c.l.b16 %v105
    %v554 = vunpack.c.h.b16 %v105
    %v555 = vunpack.c.l.b16 %v106
    %v556 = vunpack.c.h.b16 %v106
    %v557 = vunpack.c.l.b16 %v107
    %v558 = vunpack.c.h.b16 %v107
    %v559 = vunpack.c.l.b16 %v108
    %v560 = vunpack.c.h.b16 %v108
    %v561 = vunpack.c.l.b16 %v109
    %v562 = vunpack.c.h.b16 %v109
    %v563 = vunpack.c.l.b16 %v110
    %v564 = vunpack.c.h.b16 %v110
    %v565 = vunpack.c.l.b16 %v111
    %v566 = vunpack.c.h.b16 %v111
    %v567 = vunpack.c.l.b16 %v112
    %v568 = vunpack.c.h.b16 %v112
    %v569 = vunpack.c.l.b16 %v113
    %v570 = vunpack.c.h.b16 %v113
    %v571 = vunpack.c.l.b16 %v114
    %v572 = vunpack.c.h.b16 %v114
    %v573 = vunpack.c.l.b16 %v115
    %v574 = vunpack.c.h.b16 %v115
    %v575 = vunpack.c.l.b16 %v116
    %v576 = vunpack.c.h.b16 %v116
    %v577 = vunpack.c.l.b16 %v117
    %v578 = vunpack.c.h.b16 %v117
    %v579 = vunpack.c.l.b16 %v118
    %v580 = vunpack.c.h.b16 %v118
    %v581 = vunpack.c.l.b16 %v119
    %v582 = vunpack.c.h.b16 %v119
    %v583 = vunpack.c.l.b16 %v120
    %v584 = vunpack.c.h.b16 %v120
    %v585 = vunpack.c.l.b16 %v121
    %v586 = vunpack.c.h.b16 %v121
    %v587 = vunpack.c.l.b16 %v122
    %v588 = vunpack.c.h.b16 %v122
    %v589 = vunpack.c.l.b16 %v123
    %v590 = vunpack.c.h.b16 %v123
    %v591 = vunpack.c.l.b16 %v124
    %v592 = vunpack.c.h.b16 %v124
    %v593 = vunpack.c.l.b16 %v125
    %v594 = vunpack.c.h.b16 %v125
    %v595 = vunpack.c.l.b16 %v126
    %v596 = vunpack.c.h.b16 %v126
    %v597 = vunpack.c.l.b16 %v127
    %v598 = vunpack.c.h.b16 %v127
    %v599 = vunpack.c.l.b16 %v128
    %v600 = vunpack.c.h.b16 %v128
    %v601 = vunpack.c.l.b16 %v129
    %v602 = vunpack.c.h.b16 %v129
    %v603 = vunpack.c.l.b16 %v130
    %v604 = vunpack.c.h.b16 %v130
    %v605 = vunpack.c.l.b16 %v131
    %v606 = vunpack.c.h.b16 %v131
    %v607 = vunpack.c.l.b16 %v132
    %v608 = vunpack.c.h.b16 %v132
    %v609 = vunpack.c.l.b16 %v133
    %v610 = vunpack.c.h.b16 %v133
    %v611 = vunpack.c.l.b16 %v134
    %v612 = vunpack.c.h.b16 %v134
    %v613 = vunpack.c.l.b16 %v135
    %v614 = vunpack.c.h.b16 %v135
    %v615 = vunpack.c.l.b16 %v136
    %v616 = vunpack.c.h.b16 %v136
    %v617 = vunpack.c.l.b16 %v137
    %v618 = vunpack.c.h.b16 %v137
    %v619 = vunpack.c.l.b16 %v138
    %v620 = vunpack.c.h.b16 %v138
    %v621 = vunpack.c.l.b16 %v139
    %v622 = vunpack.c.h.b16 %v139
    %v623 = vunpack.c.l.b16 %v140
    %v624 = vunpack.c.h.b16 %v140
    %v625 = vunpack.c.l.b16 %v141
    %v626 = vunpack.c.h.b16 %v141
    %v627 = vunpack.c.l.b16 %v142
    %v628 = vunpack.c.h.b16 %v142
    %v629 = vunpack.c.l.b16 %v143
    %v630 = vunpack.c.h.b16 %v143
    %v631 = vunpack.c.l.b16 %v144
    %v632 = vunpack.c.h.b16 %v144
    %v633 = vunpack.c.l.b16 %v145
    %v634 = vunpack.c.h.b16 %v145
    %v635 = vunpack.c.l.b16 %v146
    %v636 = vunpack.c.h.b16 %v146
    %v637 = vunpack.c.l.b16 %v147
    %v638 = vunpack.c.h.b16 %v147
    %v639 = vunpack.c.l.b16 %v148
    %v640 = vunpack.c.h.b16 %v148
    %v641 = vunpack.c.l.b16 %v149
    %v642 = vunpack.c.h.b16 %v149
    %v643 = vunpack.c.l.b16 %v150
    %v644 = vunpack.c.h.b16 %v150
    %v645 = vunpack.c.l.b16 %v151
    %v646 = vunpack.c.h.b16 %v151
    %v647 = vunpack.c.l.b16 %v152
    %v648 = vunpack.c.h.b16 %v152
    %v649 = vunpack.c.l.b16 %v153
    %v650 = vunpack.c.h.b16 %v153
    %v651 = vunpack.c.l.b16 %v154
    %v652 = vunpack.c.h.b16 %v154
    %v653 = vunpack.c.l.b16 %v155
    %v654 = vunpack.c.h.b16 %v155
    %v655 = vunpack.c.l.b16 %v156
    %v656 = vunpack.c.h.b16 %v156
    %v657 = vunpack.c.l.b16 %v157
    %v658 = vunpack.c.h.b16 %v157
    %v659 = vunpack.c.l.b16 %v158
    %v660 = vunpack.c.h.b16 %v158
    %v661 = vunpack.c.l.b16 %v159
    %v662 = vunpack.c.h.b16 %v159
    %v663 = vunpack.c.l.b16 %v160
    %v664 = vunpack.c.h.b16 %v160
    %v665 = vunpack.c.l.b16 %v161
    %v666 = vunpack.c.h.b16 %v161
    %v667 = vunpack.c.l.b16 %v162
    %v668 = vunpack.c.h.b16 %v162
    %v669 = vunpack.c.l.b16 %v163
    %v670 = vunpack.c.h.b16 %v163
    %v671 = vunpack.c.l.b16 %v164
    %v672 = vunpack.c.h.b16 %v164
    %v673 = vunpack.c.l.b16 %v165
    %v674 = vunpack.c.h.b16 %v165
    %v675 = vunpack.c.l.b16 %v166
    %v676 = vunpack.c.h.b16 %v166
    %v677 = vunpack.c.l.b16 %v167
    %v678 = vunpack.c.h.b16 %v167
    %v679 = vunpack.c.l.b16 %v168
    %v680 = vunpack.c.h.b16 %v168
    %v681 = vunpack.c.l.b16 %v169
    %v682 = vunpack.c.h.b16 %v169
    %v683 = vunpack.c.l.b16 %v170
    %v684 = vunpack.c.h.b16 %v170
    %v685 = vunpack.c.l.b16 %v171
    %v686 = vunpack.c.h.b16 %v171
    %v687 = vunpack.c.l.b16 %v172
    %v688 = vunpack.c.h.b16 %v172
    %v689 = vunpack.c.l.b16 %v173
    %v690 = vunpack.c.h.b16 %v173
    %v691 = vunpack.c.l.b16 %v174
    %v692 = vunpack.c.h.b16 %v174
    %v693 = vunpack.c.l.b16 %v175
    %v694 = vunpack.c.h.b16 %v175
    %v695 = vunpack.c.l.b16 %v176
    %v696 = vunpack.c.h.b16 %v176
    %v697 = vunpack.c.l.b16 %v177
    %v698 = vunpack.c.h.b16 %v177
    %v699 = vunpack.c.l.b16 %v178
    %v700 = vunpack.c.h.b16 %v178
    %v701 = vunpack.c.l.b16 %v179
    %v702 = vunpack.c.h.b16 %v179
    %v703 = vunpack.c.l.b16 %v180
    %v704 = vunpack.c.h.b16 %v180
    %v705 = vunpack.c.l.b16 %v181
    %v706 = vunpack.c.h.b16 %v181
    %v707 = vunpack.c.l.b16 %v182
    %v708 = vunpack.c.h.b16 %v182
    %v709 = vunpack.c.l.b16 %v183
    %v710 = vunpack.c.h.b16 %v183
    %v711 = vunpack.c.l.b16 %v184
    %v712 = vunpack.c.h.b16 %v184
    %v713 = vunpack.c.l.b16 %v185
    %v714 = vunpack.c.h.b16 %v185
    %v715 = vunpack.c.l.b16 %v186
    %v716 = vunpack.c.h.b16 %v186
    %v717 = vunpack.c.l.b16 %v187
    %v718 = vunpack.c.h.b16 %v187
    %v719 = vunpack.c.l.b16 %v188
    %v720 = vunpack.c.h.b16 %v188
    %v721 = vunpack.c.l.b16 %v189
    %v722 = vunpack.c.h.b16 %v189
    %v723 = vunpack.c.l.b16 %v190
    %v724 = vunpack.c.h.b16 %v190
    %v725 = vunpack.c.l.b16 %v191
    %v726 = vunpack.c.h.b16 %v191
    %v727 = vunpack.c.l.b16 %v192
    %v728 = vunpack.c.h.b16 %v192
    %v729 = vunpack.c.l.b16 %v193
    %v730 = vunpack.c.h.b16 %v193
    %v731 = vunpack.c.l.b16 %v194
    %v732 = vunpack.c.h.b16 %v194
    %v733 = vunpack.c.l.b16 %v195
    %v734 = vunpack.c.h.b16 %v195
    %v735 = vunpack.c.l.b16 %v196
    %v736 = vunpack.c.h.b16 %v196
    %v737 = vunpack.c.l.b16 %v197
    %v738 = vunpack.c.h.b16 %v197
    %v739 = vunpack.c.l.b16 %v198
    %v740 = vunpack.c.h.b16 %v198
    %v741 = vunpack.c.l.b16 %v199
    %v742 = vunpack.c.h.b16 %v199
    %v743 = vunpack.c.l.b16 %v200
    %v744 = vunpack.c.h.b16 %v200
    %v745 = vunpack.c.l.b16 %v201
    %v746 = vunpack.c.h.b16 %v201
    %v747 = vunpack.c.l.b16 %v202
    %v748 = vunpack.c.h.b16 %v202
    %v749 = vunpack.c.l.b16 %v203
    %v750 = vunpack.c.h.b16 %v203
    %v751 = vunpack.c.l.b16 %v204
    %v752 = vunpack.c.h.b16 %v204
    %v753 = vunpack.c.l.b16 %v205
    %v754 = vunpack.c.h.b16 %v205
    %v755 = vunpack.c.l.b16 %v206
    %v756 = vunpack.c.h.b16 %v206
    %v757 = vunpack.c.l.b16 %v207
    %v758 = vunpack.c.h.b16 %v207
    %v759 = vunpack.c.l.b16 %v208
    %v760 = vunpack.c.h.b16 %v208
    %v761 = vunpack.c.l.b16 %v209
    %v762 = vunpack.c.h.b16 %v209
    %v763 = vunpack.c.l.b16 %v210
    %v764 = vunpack.c.h.b16 %v210
    %v765 = vunpack.c.l.b16 %v211
    %v766 = vunpack.c.h.b16 %v211
    %v767 = vunpack.c.l.b16 %v212
    %v768 = vunpack.c.h.b16 %v212
    %v769 = vunpack.c.l.b16 %v213
    %v770 = vunpack.c.h.b16 %v213
    %v771 = vunpack.c.l.b16 %v214
    %v772 = vunpack.c.h.b16 %v214
    %v773 = vunpack.c.l.b16 %v215
    %v774 = vunpack.c.h.b16 %v215
    %v775 = vunpack.c.l.b16 %v216
    %v776 = vunpack.c.h.b16 %v216
    %v777 = vunpack.c.l.b16 %v217
    %v778 = vunpack.c.h.b16 %v217
    %v779 = vunpack.c.l.b16 %v218
    %v780 = vunpack.c.h.b16 %v218
    %v781 = vunpack.c.l.b16 %v219
    %v782 = vunpack.c.h.b16 %v219
    %v783 = vunpack.c.l.b16 %v220
    %v784 = vunpack.c.h.b16 %v220
    %v785 = vunpack.c.l.b16 %v221
    %v786 = vunpack.c.h.b16 %v221
    %v787 = vunpack.c.l.b16 %v222
    %v788 = vunpack.c.h.b16 %v222
    %v789 = vunpack.c.l.b16 %v223
    %v790 = vunpack.c.h.b16 %v223
    %v791 = vunpack.c.l.b16 %v224
    %v792 = vunpack.c.h.b16 %v224
    %v793 = vunpack.c.l.b16 %v225
    %v794 = vunpack.c.h.b16 %v225
    %v795 = vunpack.c.l.b16 %v226
    %v796 = vunpack.c.h.b16 %v226
    %v797 = vunpack.c.l.b16 %v227
    %v798 = vunpack.c.h.b16 %v227
    %v799 = vunpack.c.l.b16 %v228
    %v800 = vunpack.c.h.b16 %v228
    %v801 = vunpack.c.l.b16 %v229
    %v802 = vunpack.c.h.b16 %v229
    %v803 = vunpack.c.l.b16 %v230
    %v804 = vunpack.c.h.b16 %v230
    %v805 = vunpack.c.l.b16 %v231
    %v806 = vunpack.c.h.b16 %v231
    %v807 = vunpack.c.l.b16 %v232
    %v808 = vunpack.c.h.b16 %v232
    %v809 = vunpack.c.l.b16 %v233
    %v810 = vunpack.c.h.b16 %v233
    %v811 = vunpack.c.l.b16 %v234
    %v812 = vunpack.c.h.b16 %v234
    %v813 = vunpack.c.l.b16 %v235
    %v814 = vunpack.c.h.b16 %v235
    %v815 = vunpack.c.l.b16 %v236
    %v816 = vunpack.c.h.b16 %v236
    %v817 = vunpack.c.l.b16 %v237
    %v818 = vunpack.c.h.b16 %v237
    %v819 = vunpack.c.l.b16 %v238
    %v820 = vunpack.c.h.b16 %v238
    %v821 = vunpack.c.l.b16 %v239
    %v822 = vunpack.c.h.b16 %v239
    %v823 = vunpack.c.l.b16 %v240
    %v824 = vunpack.c.h.b16 %v240
    %v825 = vunpack.c.l.b16 %v241
    %v826 = vunpack.c.h.b16 %v241
    %v827 = vunpack.c.l.b16 %v242
    %v828 = vunpack.c.h.b16 %v242
    %v829 = vunpack.c.l.b16 %v243
    %v830 = vunpack.c.h.b16 %v243
    %v831 = vunpack.c.l.b16 %v244
    %v832 = vunpack.c.h.b16 %v244
    %v833 = vunpack.c.l.b16 %v245
    %v834 = vunpack.c.h.b16 %v245
    %v835 = vunpack.c.l.b16 %v246
    %v836 = vunpack.c.h.b16 %v246
    %v837 = vunpack.c.l.b16 %v247
    %v838 = vunpack.c.h.b16 %v247
    %v839 = vunpack.c.l.b16 %v248
    %v840 = vunpack.c.h.b16 %v248
    %v841 = vunpack.c.l.b16 %v249
    %v842 = vunpack.c.h.b16 %v249
    %v843 = vunpack.c.l.b16 %v250
    %v844 = vunpack.c.h.b16 %v250
    %v845 = vunpack.c.l.b16 %v251
    %v846 = vunpack.c.h.b16 %v251
    %v847 = vunpack.c.l.b16 %v252
    %v848 = vunpack.c.h.b16 %v252
    %v849 = vunpack.c.l.b16 %v253
    %v850 = vunpack.c.h.b16 %v253
    %v851 = vunpack.c.l.b16 %v254
    %v852 = vunpack.c.h.b16 %v254
    %v853 = vunpack.c.l.b16 %v255
    %v854 = vunpack.c.h.b16 %v255
    %v855 = vunpack.c.l.b16 %v256
    %v856 = vunpack.c.h.b16 %v256
    %v857 = vunpack.c.l.b16 %v257
    %v858 = vunpack.c.h.b16 %v257
    %v859 = vunpack.c.l.b16 %v258
    %v860 = vunpack.c.h.b16 %v258
    %v861 = vunpack.c.l.b16 %v259
    %v862 = vunpack.c.h.b16 %v259
    %v863 = vunpack.c.l.b16 %v260
    %v864 = vunpack.c.h.b16 %v260
    %v865 = vunpack.c.l.b16 %v261
    %v866 = vunpack.c.h.b16 %v261
    %v867 = vunpack.c.l.b16 %v262
    %v868 = vunpack.c.h.b16 %v262
    %v869 = vunpack.c.l.b16 %v263
    %v870 = vunpack.c.h.b16 %v263
    %v871 = vunpack.c.l.b16 %v264
    %v872 = vunpack.c.h.b16 %v264
    %v873 = vunpack.c.l.b16 %v265
    %v874 = vunpack.c.h.b16 %v265
    %v875 = vunpack.c.l.b16 %v266
    %v876 = vunpack.c.h.b16 %v266
    %v877 = vunpack.c.l.b16 %v267
    %v878 = vunpack.c.h.b16 %v267
    %v879 = vunpack.c.l.b16 %v268
    %v880 = vunpack.c.h.b16 %v268
    %v881 = vunpack.c.l.b16 %v269
    %v882 = vunpack.c.h.b16 %v269
    %v883 = vunpack.c.l.b16 %v270
    %v884 = vunpack.c.h.b16 %v270
    %v885 = vunpack.c.l.b16 %v271
    %v886 = vunpack.c.h.b16 %v271
    %v887 = vunpack.c.l.b16 %v272
    %v888 = vunpack.c.h.b16 %v272
    %v889 = vunpack.c.l.b16 %v273
    %v890 = vunpack.c.h.b16 %v273
    %v891 = vunpack.c.l.b16 %v274
    %v892 = vunpack.c.h.b16 %v274
    %v893 = vunpack.c.l.b16 %v275
    %v894 = vunpack.c.h.b16 %v275
    %v895 = vpack.c.b16 %v515, %v511
    %v896 = vpack.c.b16 %v516, %v512
    %v897 = vpack.c.b16 %v517, %v513
    %v898 = vpack.c.b16 %v518, %v514
    %v899 = vpack.c.b16 %v523, %v519
    %v900 = vpack.c.b16 %v524, %v520
    %v901 = vpack.c.b16 %v525, %v521
    %v902 = vpack.c.b16 %v526, %v522
    %v903 = vpack.c.b16 %v531, %v527
    %v904 = vpack.c.b16 %v532, %v528
    %v905 = vpack.c.b16 %v533, %v529
    %v906 = vpack.c.b16 %v534, %v530
    %v907 = vpack.c.b16 %v539, %v535
    %v908 = vpack.c.b16 %v540, %v536
    %v909 = vpack.c.b16 %v541, %v537
    %v910 = vpack.c.b16 %v542, %v538
    %v911 = vpack.c.b16 %v547, %v543
    %v912 = vpack.c.b16 %v548, %v544
    %v913 = vpack.c.b16 %v549, %v545
    %v914 = vpack.c.b16 %v550, %v546
    %v915 = vpack.c.b16 %v555, %v551
    %v916 = vpack.c.b16 %v556, %v552
    %v917 = vpack.c.b16 %v557, %v553
    %v918 = vpack.c.b16 %v558, %v554
    %v919 = vpack.c.b16 %v563, %v559
    %v920 = vpack.c.b16 %v564, %v560
    %v921 = vpack.c.b16 %v565, %v561
    %v922 = vpack.c.b16 %v566, %v562
    %v923 = vpack.c.b16 %v571, %v567
    %v924 = vpack.c.b16 %v572, %v568
    %v925 = vpack.c.b16 %v573, %v569
    %v926 = vpack.c.b16 %v574, %v570
    %v927 = vpack.c.b16 %v579, %v575
    %v928 = vpack.c.b16 %v580, %v576
    %v929 = vpack.c.b16 %v581, %v577
    %v930 = vpack.c.b16 %v582, %v578
    %v931 = vpack.c.b16 %v587, %v583
    %v932 = vpack.c.b16 %v588, %v584
    %v933 = vpack.c.b16 %v589, %v585
    %v934 = vpack.c.b16 %v590, %v586
    %v935 = vpack.c.b16 %v595, %v591
    %v936 = vpack.c.b16 %v596, %v592
    %v937 = vpack.c.b16 %v597, %v593
    %v938 = vpack.c.b16 %v598, %v594
    %v939 = vpack.c.b16 %v603, %v599
    %v940 = vpack.c.b16 %v604, %v600
    %v941 = vpack.c.b16 %v605, %v601
    %v942 = vpack.c.b16 %v606, %v602
    %v943 = vpack.c.b16 %v611, %v607
    %v944 = vpack.c.b16 %v612, %v608
    %v945 = vpack.c.b16 %v613, %v609
    %v946 = vpack.c.b16 %v614, %v610
    %v947 = vpack.c.b16 %v619, %v615
    %v948 = vpack.c.b16 %v620, %v616
    %v949 = vpack.c.b16 %v621, %v617
    %v950 = vpack.c.b16 %v622, %v618
    %v951 = vpack.c.b16 %v627, %v623
    %v952 = vpack.c.b16 %v628, %v624
    %v953 = vpack.c.b16 %v629, %v625
    %v954 = vpack.c.b16 %v630, %v626
    %v955 = vpack.c.b16 %v635, %v631
    %v956 = vpack.c.b16 %v636, %v632
    %v957 = vpack.c.b16 %v637, %v633
    %v958 = vpack.c.b16 %v638, %v634
    %v959 = vpack.c.b16 %v643, %v639
    %v960 = vpack.c.b16 %v644, %v640
    %v961 = vpack.c.b16 %v645, %v641
    %v962 = vpack.c.b16 %v646, %v642
    %v963 = vpack.c.b16 %v651, %v647
    %v964 = vpack.c.b16 %v652, %v648
    %v965 = vpack.c.b16 %v653, %v649
    %v966 = vpack.c.b16 %v654, %v650
    %v967 = vpack.c.b16 %v659, %v655
    %v968 = vpack.c.b16 %v660, %v656
    %v969 = vpack.c.b16 %v661, %v657
    %v970 = vpack.c.b16 %v662, %v658
    %v971 = vpack.c.b16 %v667, %v663
    %v972 = vpack.c.b16 %v668, %v664
    %v973 = vpack.c.b16 %v669, %v665
    %v974 = vpack.c.b16 %v670, %v666
    %v975 = vpack.c.b16 %v675, %v671
    %v976 = vpack.c.b16 %v676, %v672
    %v977 = vpack.c.b16 %v677, %v673
    %v978 = vpack.c.b16 %v678, %v674
    %v979 = vpack.c.b16 %v683, %v679
    %v980 = vpack.c.b16 %v684, %v680
    %v981 = vpack.c.b16 %v685, %v681
    %v982 = vpack.c.b16 %v686, %v682
    %v983 = vpack.c.b16 %v691, %v687
    %v984 = vpack.c.b16 %v692, %v688
    %v985 = vpack.c.b16 %v693, %v689
    %v986 = vpack.c.b16 %v694, %v690
    %v987 = vpack.c.b16 %v699, %v695
    %v988 = vpack.c.b16 %v700, %v696
    %v989 = vpack.c.b16 %v701, %v697
    %v990 = vpack.c.b16 %v702, %v698
    %v991 = vpack.c.b16 %v707, %v703
    %v992 = vpack.c.b16 %v708, %v704
    %v993 = vpack.c.b16 %v709, %v705
    %v994 = vpack.c.b16 %v710, %v706
    %v995 = vpack.c.b16 %v715, %v711
    %v996 = vpack.c.b16 %v716, %v712
    %v997 = vpack.c.b16 %v717, %v713
    %v998 = vpack.c.b16 %v718, %v714
    %v999 = vpack.c.b16 %v723, %v719
    %v1000 = vpack.c.b16 %v724, %v720
    %v1001 = vpack.c.b16 %v725, %v721
    %v1002 = vpack.c.b16 %v726, %v722
    %v1003 = vpack.c.b16 %v731, %v727
    %v1004 = vpack.c.b16 %v732, %v728
    %v1005 = vpack.c.b16 %v733, %v729
    %v1006 = vpack.c.b16 %v734, %v730
    %v1007 = vpack.c.b16 %v739, %v735
    %v1008 = vpack.c.b16 %v740, %v736
    %v1009 = vpack.c.b16 %v741, %v737
    %v1010 = vpack.c.b16 %v742, %v738
    %v1011 = vpack.c.b16 %v747, %v743
    %v1012 = vpack.c.b16 %v748, %v744
    %v1013 = vpack.c.b16 %v749, %v745
    %v1014 = vpack.c.b16 %v750, %v746
    %v1015 = vpack.c.b16 %v755, %v751
    %v1016 = vpack.c.b16 %v756, %v752
    %v1017 = vpack.c.b16 %v757, %v753
    %v1018 = vpack.c.b16 %v758, %v754
    %v1019 = vpack.c.b16 %v763, %v759
    %v1020 = vpack.c.b16 %v764, %v760
    %v1021 = vpack.c.b16 %v765, %v761
    %v1022 = vpack.c.b16 %v766, %v762
    %v1023 = vpack.c.b16 %v771, %v767
    %v1024 = vpack.c.b16 %v772, %v768
    %v1025 = vpack.c.b16 %v773, %v769
    %v1026 = vpack.c.b16 %v774, %v770
    %v1027 = vpack.c.b16 %v779, %v775
    %v1028 = vpack.c.b16 %v780, %v776
    %v1029 = vpack.c.b16 %v781, %v777
    %v1030 = vpack.c.b16 %v782, %v778
    %v1031 = vpack.c.b16 %v787, %v783
    %v1032 = vpack.c.b16 %v788, %v784
    %v1033 = vpack.c.b16 %v789, %v785
    %v1034 = vpack.c.b16 %v790, %v786
    %v1035 = vpack.c.b16 %v795, %v791
    %v1036 = vpack.c.b16 %v796, %v792
    %v1037 = vpack.c.b16 %v797, %v793
    %v1038 = vpack.c.b16 %v798, %v794
    %v1039 = vpack.c.b16 %v803, %v799
    %v1040 = vpack.c.b16 %v804, %v800
    %v1041 = vpack.c.b16 %v805, %v801
    %v1042 = vpack.c.b16 %v806, %v802
    %v1043 = vpack.c.b16 %v811, %v807
    %v1044 = vpack.c.b16 %v812, %v808
    %v1045 = vpack.c.b16 %v813, %v809
    %v1046 = vpack.c.b16 %v814, %v810
    %v1047 = vpack.c.b16 %v819, %v815
    %v1048 = vpack.c.b16 %v820, %v816
    %v1049 = vpack.c.b16 %v821, %v817
    %v1050 = vpack.c.b16 %v822, %v818
    %v1051 = vpack.c.b16 %v827, %v823
    %v1052 = vpack.c.b16 %v828, %v824
    %v1053 = vpack.c.b16 %v829, %v825
    %v1054 = vpack.c.b16 %v830, %v826
    %v1055 = vpack.c.b16 %v835, %v831
    %v1056 = vpack.c.b16 %v836, %v832
    %v1057 = vpack.c.b16 %v837, %v833
    %v1058 = vpack.c.b16 %v838, %v834
    %v1059 = vpack.c.b16 %v843, %v839
    %v1060 = vpack.c.b16 %v844, %v840
    %v1061 = vpack.c.b16 %v845, %v841
    %v1062 = vpack.c.b16 %v846, %v842
    %v1063 = vpack.c.b16 %v851, %v847
    %v1064 = vpack.c.b16 %v852, %v848
    %v1065 = vpack.c.b16 %v853, %v849
    %v1066 = vpack.c.b16 %v854, %v850
    %v1067 = vpack.c.b16 %v859, %v855
    %v1068 = vpack.c.b16 %v860, %v856
    %v1069 = vpack.c.b16 %v861, %v857
    %v1070 = vpack.c.b16 %v862, %v858
    %v1071 = vpack.c.b16 %v867, %v863
    %v1072 = vpack.c.b16 %v868, %v864
    %v1073 = vpack.c.b16 %v869, %v865
    %v1074 = vpack.c.b16 %v870, %v866
    %v1075 = vpack.c.b16 %v875, %v871
    %v1076 = vpack.c.b16 %v876, %v872
    %v1077 = vpack.c.b16 %v877, %v873
    %v1078 = vpack.c.b16 %v878, %v874
    %v1079 = vpack.c.b16 %v883, %v879
    %v1080 = vpack.c.b16 %v884, %v880
    %v1081 = vpack.c.b16 %v885, %v881
    %v1082 = vpack.c.b16 %v886, %v882
    %v1083 = vpack.c.b16 %v891, %v887
    %v1084 = vpack.c.b16 %v892, %v888
    %v1085 = vpack.c.b16 %v893, %v889
    %v1086 = vpack.c.b16 %v894, %v890
    %1279 = vmatprep.subr.bf16.mxu0 %v896
    %1280 = vmatpush1.bf16.msra.mxu0 %v895
    %1281 = vmatprep.subr.bf16.mxu0 %v900
    %1282 = vmatpush1.bf16.msra.mxu0 %v899
    %1283 = vmatprep.subr.bf16.mxu0 %v904
    %1284 = vmatpush1.bf16.msra.mxu0 %v903
    %1285 = vmatprep.subr.bf16.mxu0 %v908
    %1286 = vmatpush1.bf16.msra.mxu0 %v907
    %1287 = vmatprep.subr.bf16.mxu0 %v912
    %1288 = vmatpush1.bf16.msra.mxu0 %v911
    %1289 = vmatprep.subr.bf16.mxu0 %v916
    %1290 = vmatpush1.bf16.msra.mxu0 %v915
    %1291 = vmatprep.subr.bf16.mxu0 %v920
    %1292 = vmatpush1.bf16.msra.mxu0 %v919
    %1293 = vmatprep.subr.bf16.mxu0 %v924
    %1294 = vmatpush1.bf16.msra.mxu0 %v923
    %1295 = vmatprep.subr.bf16.mxu0 %v928
    %1296 = vmatpush1.bf16.msra.mxu0 %v927
    %1297 = vmatprep.subr.bf16.mxu0 %v932
    %1298 = vmatpush1.bf16.msra.mxu0 %v931
    %1299 = vmatprep.subr.bf16.mxu0 %v936
    %1300 = vmatpush1.bf16.msra.mxu0 %v935
    %1301 = vmatprep.subr.bf16.mxu0 %v940
    %1302 = vmatpush1.bf16.msra.mxu0 %v939
    %1303 = vmatprep.subr.bf16.mxu0 %v944
    %1304 = vmatpush1.bf16.msra.mxu0 %v943
    %1305 = vmatprep.subr.bf16.mxu0 %v948
    %1306 = vmatpush1.bf16.msra.mxu0 %v947
    %1307 = vmatprep.subr.bf16.mxu0 %v952
    %1308 = vmatpush1.bf16.msra.mxu0 %v951
    %1309 = vmatprep.subr.bf16.mxu0 %v956
    %1310 = vmatpush1.bf16.msra.mxu0 %v955
    %1311 = vmatprep.mubr.bf16.mxu0 %v308
    %1312 = vmatmul.mubr.bf16.gmra.mrb[0].mxu0 %v307
    %v1313 = vpop.f32.mrb[0].mxu0
    %v1314 = vadd.f32 %v281, %v1313
    %v1315 = vpop.f32.mrb[0].mxu0
    %v1316 = vadd.f32 %v285, %v1315
    %v1317 = vpop.f32.mrb[0].mxu0
    %v1318 = vpop.f32.mrb[0].mxu0
    %1319 = vdwg.mxu0
    %1320 = vmatprep.subr.bf16.mxu0 %v960
    %1321 = vmatpush1.bf16.msra.mxu0 %v959
    %1322 = vmatprep.subr.bf16.mxu0 %v964
    %1323 = vmatpush1.bf16.msra.mxu0 %v963
    %1324 = vmatprep.subr.bf16.mxu0 %v968
    %1325 = vmatpush1.bf16.msra.mxu0 %v967
    %1326 = vmatprep.subr.bf16.mxu0 %v972
    %1327 = vmatpush1.bf16.msra.mxu0 %v971
    %1328 = vmatprep.subr.bf16.mxu0 %v976
    %1329 = vmatpush1.bf16.msra.mxu0 %v975
    %1330 = vmatprep.subr.bf16.mxu0 %v980
    %1331 = vmatpush1.bf16.msra.mxu0 %v979
    %1332 = vmatprep.subr.bf16.mxu0 %v984
    %1333 = vmatpush1.bf16.msra.mxu0 %v983
    %1334 = vmatprep.subr.bf16.mxu0 %v988
    %1335 = vmatpush1.bf16.msra.mxu0 %v987
    %1336 = vmatprep.subr.bf16.mxu0 %v992
    %1337 = vmatpush1.bf16.msra.mxu0 %v991
    %1338 = vmatprep.subr.bf16.mxu0 %v996
    %1339 = vmatpush1.bf16.msra.mxu0 %v995
    %1340 = vmatprep.subr.bf16.mxu0 %v1000
    %1341 = vmatpush1.bf16.msra.mxu0 %v999
    %1342 = vmatprep.subr.bf16.mxu0 %v1004
    %1343 = vmatpush1.bf16.msra.mxu0 %v1003
    %1344 = vmatprep.subr.bf16.mxu0 %v1008
    %1345 = vmatpush1.bf16.msra.mxu0 %v1007
    %1346 = vmatprep.subr.bf16.mxu0 %v1012
    %1347 = vmatpush1.bf16.msra.mxu0 %v1011
    %1348 = vmatprep.subr.bf16.mxu0 %v1016
    %1349 = vmatpush1.bf16.msra.mxu0 %v1015
    %1350 = vmatprep.subr.bf16.mxu0 %v1020
    %1351 = vmatpush1.bf16.msra.mxu0 %v1019
    %1352 = vmatprep.mubr.bf16.mxu0 %v310
    %1353 = vmatmul.mubr.bf16.gmra.mrb[0].mxu0 %v309
    %v1354 = vpop.f32.mrb[0].mxu0
    %v1355 = vadd.f32 %v1314, %v1354
    %v1356 = vpop.f32.mrb[0].mxu0
    %v1357 = vadd.f32 %v1316, %v1356
    %v1358 = vpop.f32.mrb[0].mxu0
    %v1359 = vpop.f32.mrb[0].mxu0
    %1360 = vdwg.mxu0
    %1361 = vmatprep.subr.bf16.mxu0 %v1024
    %1362 = vmatpush1.bf16.msra.mxu0 %v1023
    %1363 = vmatprep.subr.bf16.mxu0 %v1028
    %1364 = vmatpush1.bf16.msra.mxu0 %v1027
    %1365 = vmatprep.subr.bf16.mxu0 %v1032
    %1366 = vmatpush1.bf16.msra.mxu0 %v1031
    %1367 = vmatprep.subr.bf16.mxu0 %v1036
    %1368 = vmatpush1.bf16.msra.mxu0 %v1035
    %1369 = vmatprep.subr.bf16.mxu0 %v1040
    %1370 = vmatpush1.bf16.msra.mxu0 %v1039
    %1371 = vmatprep.subr.bf16.mxu0 %v1044
    %1372 = vmatpush1.bf16.msra.mxu0 %v1043
    %1373 = vmatprep.subr.bf16.mxu0 %v1048
    %1374 = vmatpush1.bf16.msra.mxu0 %v1047
    %1375 = vmatprep.subr.bf16.mxu0 %v1052
    %1376 = vmatpush1.bf16.msra.mxu0 %v1051
    %1377 = vmatprep.subr.bf16.mxu0 %v1056
    %1378 = vmatpush1.bf16.msra.mxu0 %v1055
    %1379 = vmatprep.subr.bf16.mxu0 %v1060
    %1380 = vmatpush1.bf16.msra.mxu0 %v1059
    %1381 = vmatprep.subr.bf16.mxu0 %v1064
    %1382 = vmatpush1.bf16.msra.mxu0 %v1063
    %1383 = vmatprep.subr.bf16.mxu0 %v1068
    %1384 = vmatpush1.bf16.msra.mxu0 %v1067
    %1385 = vmatprep.subr.bf16.mxu0 %v1072
    %1386 = vmatpush1.bf16.msra.mxu0 %v1071
    %1387 = vmatprep.subr.bf16.mxu0 %v1076
    %1388 = vmatpush1.bf16.msra.mxu0 %v1075
    %1389 = vmatprep.subr.bf16.mxu0 %v1080
    %1390 = vmatpush1.bf16.msra.mxu0 %v1079
    %1391 = vmatprep.subr.bf16.mxu0 %v1084
    %1392 = vmatpush1.bf16.msra.mxu0 %v1083
    %1393 = vmatprep.mubr.bf16.mxu0 %v312
    %1394 = vmatmul.mubr.bf16.gmra.mrb[0].mxu0 %v311
    %v1395 = vpop.f32.mrb[0].mxu0
    %v1396 = vadd.f32 %v1355, %v1395
    %v1397 = vpop.f32.mrb[0].mxu0
    %v1398 = vadd.f32 %v1357, %v1397
    %v1399 = vpop.f32.mrb[0].mxu0
    %v1400 = vpop.f32.mrb[0].mxu0
    %1401 = vdwg.mxu0
    %1402 = vmatprep.subr.bf16.mxu0 %v898
    %1403 = vmatpush1.bf16.msra.mxu0 %v897
    %1404 = vmatprep.subr.bf16.mxu0 %v902
    %1405 = vmatpush1.bf16.msra.mxu0 %v901
    %1406 = vmatprep.subr.bf16.mxu0 %v906
    %1407 = vmatpush1.bf16.msra.mxu0 %v905
    %1408 = vmatprep.subr.bf16.mxu0 %v910
    %1409 = vmatpush1.bf16.msra.mxu0 %v909
    %1410 = vmatprep.subr.bf16.mxu0 %v914
    %1411 = vmatpush1.bf16.msra.mxu0 %v913
    %1412 = vmatprep.subr.bf16.mxu0 %v918
    %1413 = vmatpush1.bf16.msra.mxu0 %v917
    %1414 = vmatprep.subr.bf16.mxu0 %v922
    %1415 = vmatpush1.bf16.msra.mxu0 %v921
    %1416 = vmatprep.subr.bf16.mxu0 %v926
    %1417 = vmatpush1.bf16.msra.mxu0 %v925
    %1418 = vmatprep.subr.bf16.mxu0 %v930
    %1419 = vmatpush1.bf16.msra.mxu0 %v929
    %1420 = vmatprep.subr.bf16.mxu0 %v934
    %1421 = vmatpush1.bf16.msra.mxu0 %v933
    %1422 = vmatprep.subr.bf16.mxu0 %v938
    %1423 = vmatpush1.bf16.msra.mxu0 %v937
    %1424 = vmatprep.subr.bf16.mxu0 %v942
    %1425 = vmatpush1.bf16.msra.mxu0 %v941
    %1426 = vmatprep.subr.bf16.mxu0 %v946
    %1427 = vmatpush1.bf16.msra.mxu0 %v945
    %1428 = vmatprep.subr.bf16.mxu0 %v950
    %1429 = vmatpush1.bf16.msra.mxu0 %v949
    %1430 = vmatprep.subr.bf16.mxu0 %v954
    %1431 = vmatpush1.bf16.msra.mxu0 %v953
    %1432 = vmatprep.subr.bf16.mxu0 %v958
    %1433 = vmatpush1.bf16.msra.mxu0 %v957
    %1434 = vmatprep.mubr.bf16.mxu0 %v308
    %1435 = vmatmul.mubr.bf16.gmra.mrb[0].mxu0 %v307
    %v1436 = vpop.f32.mrb[0].mxu0
    %v1437 = vadd.f32 %v289, %v1436
    %v1438 = vpop.f32.mrb[0].mxu0
    %v1439 = vadd.f32 %v293, %v1438
    %v1440 = vpop.f32.mrb[0].mxu0
    %v1441 = vpop.f32.mrb[0].mxu0
    %1442 = vdwg.mxu0
    %1443 = vmatprep.subr.bf16.mxu0 %v962
    %1444 = vmatpush1.bf16.msra.mxu0 %v961
    %1445 = vmatprep.subr.bf16.mxu0 %v966
    %1446 = vmatpush1.bf16.msra.mxu0 %v965
    %1447 = vmatprep.subr.bf16.mxu0 %v970
    %1448 = vmatpush1.bf16.msra.mxu0 %v969
    %1449 = vmatprep.subr.bf16.mxu0 %v974
    %1450 = vmatpush1.bf16.msra.mxu0 %v973
    %1451 = vmatprep.subr.bf16.mxu0 %v978
    %1452 = vmatpush1.bf16.msra.mxu0 %v977
    %1453 = vmatprep.subr.bf16.mxu0 %v982
    %1454 = vmatpush1.bf16.msra.mxu0 %v981
    %1455 = vmatprep.subr.bf16.mxu0 %v986
    %1456 = vmatpush1.bf16.msra.mxu0 %v985
    %1457 = vmatprep.subr.bf16.mxu0 %v990
    %1458 = vmatpush1.bf16.msra.mxu0 %v989
    %1459 = vmatprep.subr.bf16.mxu0 %v994
    %1460 = vmatpush1.bf16.msra.mxu0 %v993
    %1461 = vmatprep.subr.bf16.mxu0 %v998
    %1462 = vmatpush1.bf16.msra.mxu0 %v997
    %1463 = vmatprep.subr.bf16.mxu0 %v1002
    %1464 = vmatpush1.bf16.msra.mxu0 %v1001
    %1465 = vmatprep.subr.bf16.mxu0 %v1006
    %1466 = vmatpush1.bf16.msra.mxu0 %v1005
    %1467 = vmatprep.subr.bf16.mxu0 %v1010
    %1468 = vmatpush1.bf16.msra.mxu0 %v1009
    %1469 = vmatprep.subr.bf16.mxu0 %v1014
    %1470 = vmatpush1.bf16.msra.mxu0 %v1013
    %1471 = vmatprep.subr.bf16.mxu0 %v1018
    %1472 = vmatpush1.bf16.msra.mxu0 %v1017
    %1473 = vmatprep.subr.bf16.mxu0 %v1022
    %1474 = vmatpush1.bf16.msra.mxu0 %v1021
    %1475 = vmatprep.mubr.bf16.mxu0 %v310
    %1476 = vmatmul.mubr.bf16.gmra.mrb[0].mxu0 %v309
    %v1477 = vpop.f32.mrb[0].mxu0
    %v1478 = vadd.f32 %v1437, %v1477
    %v1479 = vpop.f32.mrb[0].mxu0
    %v1480 = vadd.f32 %v1439, %v1479
    %v1481 = vpop.f32.mrb[0].mxu0
    %v1482 = vpop.f32.mrb[0].mxu0
    %1483 = vdwg.mxu0
    %1484 = vmatprep.subr.bf16.mxu0 %v1026
    %1485 = vmatpush1.bf16.msra.mxu0 %v1025
    %1486 = vmatprep.subr.bf16.mxu0 %v1030
    %1487 = vmatpush1.bf16.msra.mxu0 %v1029
    %1488 = vmatprep.subr.bf16.mxu0 %v1034
    %1489 = vmatpush1.bf16.msra.mxu0 %v1033
    %1490 = vmatprep.subr.bf16.mxu0 %v1038
    %1491 = vmatpush1.bf16.msra.mxu0 %v1037
    %1492 = vmatprep.subr.bf16.mxu0 %v1042
    %1493 = vmatpush1.bf16.msra.mxu0 %v1041
    %1494 = vmatprep.subr.bf16.mxu0 %v1046
    %1495 = vmatpush1.bf16.msra.mxu0 %v1045
    %1496 = vmatprep.subr.bf16.mxu0 %v1050
    %1497 = vmatpush1.bf16.msra.mxu0 %v1049
    %1498 = vmatprep.subr.bf16.mxu0 %v1054
    %1499 = vmatpush1.bf16.msra.mxu0 %v1053
    %1500 = vmatprep.subr.bf16.mxu0 %v1058
    %1501 = vmatpush1.bf16.msra.mxu0 %v1057
    %1502 = vmatprep.subr.bf16.mxu0 %v1062
    %1503 = vmatpush1.bf16.msra.mxu0 %v1061
    %1504 = vmatprep.subr.bf16.mxu0 %v1066
    %1505 = vmatpush1.bf16.msra.mxu0 %v1065
    %1506 = vmatprep.subr.bf16.mxu0 %v1070
    %1507 = vmatpush1.bf16.msra.mxu0 %v1069
    %1508 = vmatprep.subr.bf16.mxu0 %v1074
    %1509 = vmatpush1.bf16.msra.mxu0 %v1073
    %1510 = vmatprep.subr.bf16.mxu0 %v1078
    %1511 = vmatpush1.bf16.msra.mxu0 %v1077
    %1512 = vmatprep.subr.bf16.mxu0 %v1082
    %1513 = vmatpush1.bf16.msra.mxu0 %v1081
    %1514 = vmatprep.subr.bf16.mxu0 %v1086
    %1515 = vmatpush1.bf16.msra.mxu0 %v1085
    %1516 = vmatprep.mubr.bf16.mxu0 %v312
    %1517 = vmatmul.mubr.bf16.gmra.mrb[0].mxu0 %v311
    %v1518 = vpop.f32.mrb[0].mxu0
    %v1519 = vadd.f32 %v1478, %v1518
    %v1520 = vpop.f32.mrb[0].mxu0
    %v1521 = vadd.f32 %v1480, %v1520
    %v1522 = vpop.f32.mrb[0].mxu0
    %v1523 = vpop.f32.mrb[0].mxu0
    %1524 = vdwg.mxu0
    %v1525 = vmax.f32 %v1396, 0.0
    %v1526 = vmax.f32 %v1398, 0.0
    %v1527 = vmax.f32 %v1519, 0.0
    %v1528 = vmax.f32 %v1521, 0.0
    %v1529 = vpack.c.bf16 %v1525, %v1525
    %v1530 = vpack.c.bf16 %v1526, %v1526
    %v1531 = vpack.c.bf16 %v1527, %v1527
    %v1532 = vpack.c.bf16 %v1528, %v1528
    %v1533 = vld [vmem:[#allocation7] sm:$0xff]
    %v1534 = vld [vmem:[#allocation7 + $0x8] sm:$0xff]
    %v1535 = vld [vmem:[#allocation7 + $0x10] sm:$0xff]
    %v1536 = vld [vmem:[#allocation7 + $0x18] sm:$0xff]
    %v1537 = vld [vmem:[#allocation7 + $0x20] sm:$0xff]
    %v1538 = vld [vmem:[#allocation7 + $0x28] sm:$0xff]
    %v1539 = vld [vmem:[#allocation7 + $0x30] sm:$0xff]
    %v1540 = vld [vmem:[#allocation7 + $0x38] sm:$0xff]
    %v1541 = vld [vmem:[#allocation7 + $0x40] sm:$0xff]
    %v1542 = vld [vmem:[#allocation7 + $0x48] sm:$0xff]
    %v1543 = vld [vmem:[#allocation7 + $0x50] sm:$0xff]
    %v1544 = vld [vmem:[#allocation7 + $0x58] sm:$0xff]
    %v1545 = vld [vmem:[#allocation7 + $0x60] sm:$0xff]
    %v1546 = vld [vmem:[#allocation7 + $0x68] sm:$0xff]
    %v1547 = vld [vmem:[#allocation7 + $0x70] sm:$0xff]
    %v1548 = vld [vmem:[#allocation7 + $0x78] sm:$0xff]
    %v1549 = vld [vmem:[#allocation7 + $0x80] sm:$0xff]
    %v1550 = vld [vmem:[#allocation7 + $0x88] sm:$0xff]
    %v1551 = vld [vmem:[#allocation7 + $0x90] sm:$0xff]
    %v1552 = vld [vmem:[#allocation7 + $0x98] sm:$0xff]
    %v1553 = vld [vmem:[#allocation7 + $0xa0] sm:$0xff]
    %v1554 = vld [vmem:[#allocation7 + $0xa8] sm:$0xff]
    %v1555 = vld [vmem:[#allocation7 + $0xb0] sm:$0xff]
    %v1556 = vld [vmem:[#allocation7 + $0xb8] sm:$0xff]
    %v1557 = vld [vmem:[#allocation7 + $0xc0] sm:$0xff]
    %v1558 = vld [vmem:[#allocation7 + $0xc8] sm:$0xff]
    %v1559 = vld [vmem:[#allocation7 + $0xd0] sm:$0xff]
    %v1560 = vld [vmem:[#allocation7 + $0xd8] sm:$0xff]
    %v1561 = vld [vmem:[#allocation7 + $0xe0] sm:$0xff]
    %v1562 = vld [vmem:[#allocation7 + $0xe8] sm:$0xff]
    %v1563 = vld [vmem:[#allocation7 + $0xf0] sm:$0xff]
    %v1564 = vld [vmem:[#allocation7 + $0xf8] sm:$0xff]
    %v1565 = vld [vmem:[#allocation7 + $0x100] sm:$0xff]
    %v1566 = vld [vmem:[#allocation7 + $0x108] sm:$0xff]
    %v1567 = vld [vmem:[#allocation7 + $0x110] sm:$0xff]
    %v1568 = vld [vmem:[#allocation7 + $0x118] sm:$0xff]
    %v1569 = vld [vmem:[#allocation7 + $0x120] sm:$0xff]
    %v1570 = vld [vmem:[#allocation7 + $0x128] sm:$0xff]
    %v1571 = vld [vmem:[#allocation7 + $0x130] sm:$0xff]
    %v1572 = vld [vmem:[#allocation7 + $0x138] sm:$0xff]
    %v1573 = vld [vmem:[#allocation7 + $0x140] sm:$0xff]
    %v1574 = vld [vmem:[#allocation7 + $0x148] sm:$0xff]
    %v1575 = vld [vmem:[#allocation7 + $0x150] sm:$0xff]
    %v1576 = vld [vmem:[#allocation7 + $0x158] sm:$0xff]
    %v1577 = vld [vmem:[#allocation7 + $0x160] sm:$0xff]
    %v1578 = vld [vmem:[#allocation7 + $0x168] sm:$0xff]
    %v1579 = vld [vmem:[#allocation7 + $0x170] sm:$0xff]
    %v1580 = vld [vmem:[#allocation7 + $0x178] sm:$0xff]
    %v1581 = vld [vmem:[#allocation7 + $0x180] sm:$0xff]
    %v1582 = vld [vmem:[#allocation7 + $0x188] sm:$0xff]
    %v1583 = vld [vmem:[#allocation7 + $0x190] sm:$0xff]
    %v1584 = vld [vmem:[#allocation7 + $0x198] sm:$0xff]
    %v1585 = vld [vmem:[#allocation7 + $0x1a0] sm:$0xff]
    %v1586 = vld [vmem:[#allocation7 + $0x1a8] sm:$0xff]
    %v1587 = vld [vmem:[#allocation7 + $0x1b0] sm:$0xff]
    %v1588 = vld [vmem:[#allocation7 + $0x1b8] sm:$0xff]
    %v1589 = vld [vmem:[#allocation7 + $0x1c0] sm:$0xff]
    %v1590 = vld [vmem:[#allocation7 + $0x1c8] sm:$0xff]
    %v1591 = vld [vmem:[#allocation7 + $0x1d0] sm:$0xff]
    %v1592 = vld [vmem:[#allocation7 + $0x1d8] sm:$0xff]
    %v1593 = vld [vmem:[#allocation7 + $0x1e0] sm:$0xff]
    %v1594 = vld [vmem:[#allocation7 + $0x1e8] sm:$0xff]
    %v1595 = vld [vmem:[#allocation7 + $0x1f0] sm:$0xff]
    %v1596 = vld [vmem:[#allocation7 + $0x1f8] sm:$0xff]
    %v1597 = vld [vmem:[%s4] sm:$0x3]
    %v1599 = vlaneseq
    %v1600 = vshrl.u32 %v1599, 7
    %v1601 = vsub.s32 0, %v1600
    %v1602 = vrot.slane %v1597, %v1601
    %v1603 = vlaneseq
    %v1604 = vshrl.u32 %v1603, 7
    %v1605 = vsub.s32 1, %v1604
    %v1606 = vrot.slane %v1597, %v1605
    %v1673 = vunpack.c.l.b16 %v1533
    %v1674 = vunpack.c.h.b16 %v1533
    %v1675 = vunpack.c.l.b16 %v1534
    %v1676 = vunpack.c.h.b16 %v1534
    %v1677 = vunpack.c.l.b16 %v1535
    %v1678 = vunpack.c.h.b16 %v1535
    %v1679 = vunpack.c.l.b16 %v1536
    %v1680 = vunpack.c.h.b16 %v1536
    %v1681 = vunpack.c.l.b16 %v1537
    %v1682 = vunpack.c.h.b16 %v1537
    %v1683 = vunpack.c.l.b16 %v1538
    %v1684 = vunpack.c.h.b16 %v1538
    %v1685 = vunpack.c.l.b16 %v1539
    %v1686 = vunpack.c.h.b16 %v1539
    %v1687 = vunpack.c.l.b16 %v1540
    %v1688 = vunpack.c.h.b16 %v1540
    %v1689 = vunpack.c.l.b16 %v1541
    %v1690 = vunpack.c.h.b16 %v1541
    %v1691 = vunpack.c.l.b16 %v1542
    %v1692 = vunpack.c.h.b16 %v1542
    %v1693 = vunpack.c.l.b16 %v1543
    %v1694 = vunpack.c.h.b16 %v1543
    %v1695 = vunpack.c.l.b16 %v1544
    %v1696 = vunpack.c.h.b16 %v1544
    %v1697 = vunpack.c.l.b16 %v1545
    %v1698 = vunpack.c.h.b16 %v1545
    %v1699 = vunpack.c.l.b16 %v1546
    %v1700 = vunpack.c.h.b16 %v1546
    %v1701 = vunpack.c.l.b16 %v1547
    %v1702 = vunpack.c.h.b16 %v1547
    %v1703 = vunpack.c.l.b16 %v1548
    %v1704 = vunpack.c.h.b16 %v1548
    %v1705 = vunpack.c.l.b16 %v1549
    %v1706 = vunpack.c.h.b16 %v1549
    %v1707 = vunpack.c.l.b16 %v1550
    %v1708 = vunpack.c.h.b16 %v1550
    %v1709 = vunpack.c.l.b16 %v1551
    %v1710 = vunpack.c.h.b16 %v1551
    %v1711 = vunpack.c.l.b16 %v1552
    %v1712 = vunpack.c.h.b16 %v1552
    %v1713 = vunpack.c.l.b16 %v1553
    %v1714 = vunpack.c.h.b16 %v1553
    %v1715 = vunpack.c.l.b16 %v1554
    %v1716 = vunpack.c.h.b16 %v1554
    %v1717 = vunpack.c.l.b16 %v1555
    %v1718 = vunpack.c.h.b16 %v1555
    %v1719 = vunpack.c.l.b16 %v1556
    %v1720 = vunpack.c.h.b16 %v1556
    %v1721 = vunpack.c.l.b16 %v1557
    %v1722 = vunpack.c.h.b16 %v1557
    %v1723 = vunpack.c.l.b16 %v1558
    %v1724 = vunpack.c.h.b16 %v1558
    %v1725 = vunpack.c.l.b16 %v1559
    %v1726 = vunpack.c.h.b16 %v1559
    %v1727 = vunpack.c.l.b16 %v1560
    %v1728 = vunpack.c.h.b16 %v1560
    %v1729 = vunpack.c.l.b16 %v1561
    %v1730 = vunpack.c.h.b16 %v1561
    %v1731 = vunpack.c.l.b16 %v1562
    %v1732 = vunpack.c.h.b16 %v1562
    %v1733 = vunpack.c.l.b16 %v1563
    %v1734 = vunpack.c.h.b16 %v1563
    %v1735 = vunpack.c.l.b16 %v1564
    %v1736 = vunpack.c.h.b16 %v1564
    %v1737 = vunpack.c.l.b16 %v1565
    %v1738 = vunpack.c.h.b16 %v1565
    %v1739 = vunpack.c.l.b16 %v1566
    %v1740 = vunpack.c.h.b16 %v1566
    %v1741 = vunpack.c.l.b16 %v1567
    %v1742 = vunpack.c.h.b16 %v1567
    %v1743 = vunpack.c.l.b16 %v1568
    %v1744 = vunpack.c.h.b16 %v1568
    %v1745 = vunpack.c.l.b16 %v1569
    %v1746 = vunpack.c.h.b16 %v1569
    %v1747 = vunpack.c.l.b16 %v1570
    %v1748 = vunpack.c.h.b16 %v1570
    %v1749 = vunpack.c.l.b16 %v1571
    %v1750 = vunpack.c.h.b16 %v1571
    %v1751 = vunpack.c.l.b16 %v1572
    %v1752 = vunpack.c.h.b16 %v1572
    %v1753 = vunpack.c.l.b16 %v1573
    %v1754 = vunpack.c.h.b16 %v1573
    %v1755 = vunpack.c.l.b16 %v1574
    %v1756 = vunpack.c.h.b16 %v1574
    %v1757 = vunpack.c.l.b16 %v1575
    %v1758 = vunpack.c.h.b16 %v1575
    %v1759 = vunpack.c.l.b16 %v1576
    %v1760 = vunpack.c.h.b16 %v1576
    %v1761 = vunpack.c.l.b16 %v1577
    %v1762 = vunpack.c.h.b16 %v1577
    %v1763 = vunpack.c.l.b16 %v1578
    %v1764 = vunpack.c.h.b16 %v1578
    %v1765 = vunpack.c.l.b16 %v1579
    %v1766 = vunpack.c.h.b16 %v1579
    %v1767 = vunpack.c.l.b16 %v1580
    %v1768 = vunpack.c.h.b16 %v1580
    %v1769 = vunpack.c.l.b16 %v1581
    %v1770 = vunpack.c.h.b16 %v1581
    %v1771 = vunpack.c.l.b16 %v1582
    %v1772 = vunpack.c.h.b16 %v1582
    %v1773 = vunpack.c.l.b16 %v1583
    %v1774 = vunpack.c.h.b16 %v1583
    %v1775 = vunpack.c.l.b16 %v1584
    %v1776 = vunpack.c.h.b16 %v1584
    %v1777 = vunpack.c.l.b16 %v1585
    %v1778 = vunpack.c.h.b16 %v1585
    %v1779 = vunpack.c.l.b16 %v1586
    %v1780 = vunpack.c.h.b16 %v1586
    %v1781 = vunpack.c.l.b16 %v1587
    %v1782 = vunpack.c.h.b16 %v1587
    %v1783 = vunpack.c.l.b16 %v1588
    %v1784 = vunpack.c.h.b16 %v1588
    %v1785 = vunpack.c.l.b16 %v1589
    %v1786 = vunpack.c.h.b16 %v1589
    %v1787 = vunpack.c.l.b16 %v1590
    %v1788 = vunpack.c.h.b16 %v1590
    %v1789 = vunpack.c.l.b16 %v1591
    %v1790 = vunpack.c.h.b16 %v1591
    %v1791 = vunpack.c.l.b16 %v1592
    %v1792 = vunpack.c.h.b16 %v1592
    %v1793 = vunpack.c.l.b16 %v1593
    %v1794 = vunpack.c.h.b16 %v1593
    %v1795 = vunpack.c.l.b16 %v1594
    %v1796 = vunpack.c.h.b16 %v1594
    %v1797 = vunpack.c.l.b16 %v1595
    %v1798 = vunpack.c.h.b16 %v1595
    %v1799 = vunpack.c.l.b16 %v1596
    %v1800 = vunpack.c.h.b16 %v1596
    %v1801 = vpack.c.b16 %v1675, %v1673
    %v1802 = vpack.c.b16 %v1676, %v1674
    %v1803 = vpack.c.b16 %v1679, %v1677
    %v1804 = vpack.c.b16 %v1680, %v1678
    %v1805 = vpack.c.b16 %v1683, %v1681
    %v1806 = vpack.c.b16 %v1684, %v1682
    %v1807 = vpack.c.b16 %v1687, %v1685
    %v1808 = vpack.c.b16 %v1688, %v1686
    %v1809 = vpack.c.b16 %v1691, %v1689
    %v1810 = vpack.c.b16 %v1692, %v1690
    %v1811 = vpack.c.b16 %v1695, %v1693
    %v1812 = vpack.c.b16 %v1696, %v1694
    %v1813 = vpack.c.b16 %v1699, %v1697
    %v1814 = vpack.c.b16 %v1700, %v1698
    %v1815 = vpack.c.b16 %v1703, %v1701
    %v1816 = vpack.c.b16 %v1704, %v1702
    %v1817 = vpack.c.b16 %v1707, %v1705
    %v1818 = vpack.c.b16 %v1708, %v1706
    %v1819 = vpack.c.b16 %v1711, %v1709
    %v1820 = vpack.c.b16 %v1712, %v1710
    %v1821 = vpack.c.b16 %v1715, %v1713
    %v1822 = vpack.c.b16 %v1716, %v1714
    %v1823 = vpack.c.b16 %v1719, %v1717
    %v1824 = vpack.c.b16 %v1720, %v1718
    %v1825 = vpack.c.b16 %v1723, %v1721
    %v1826 = vpack.c.b16 %v1724, %v1722
    %v1827 = vpack.c.b16 %v1727, %v1725
    %v1828 = vpack.c.b16 %v1728, %v1726
    %v1829 = vpack.c.b16 %v1731, %v1729
    %v1830 = vpack.c.b16 %v1732, %v1730
    %v1831 = vpack.c.b16 %v1735, %v1733
    %v1832 = vpack.c.b16 %v1736, %v1734
    %v1833 = vpack.c.b16 %v1739, %v1737
    %v1834 = vpack.c.b16 %v1740, %v1738
    %v1835 = vpack.c.b16 %v1743, %v1741
    %v1836 = vpack.c.b16 %v1744, %v1742
    %v1837 = vpack.c.b16 %v1747, %v1745
    %v1838 = vpack.c.b16 %v1748, %v1746
    %v1839 = vpack.c.b16 %v1751, %v1749
    %v1840 = vpack.c.b16 %v1752, %v1750
    %v1841 = vpack.c.b16 %v1755, %v1753
    %v1842 = vpack.c.b16 %v1756, %v1754
    %v1843 = vpack.c.b16 %v1759, %v1757
    %v1844 = vpack.c.b16 %v1760, %v1758
    %v1845 = vpack.c.b16 %v1763, %v1761
    %v1846 = vpack.c.b16 %v1764, %v1762
    %v1847 = vpack.c.b16 %v1767, %v1765
    %v1848 = vpack.c.b16 %v1768, %v1766
    %v1849 = vpack.c.b16 %v1771, %v1769
    %v1850 = vpack.c.b16 %v1772, %v1770
    %v1851 = vpack.c.b16 %v1775, %v1773
    %v1852 = vpack.c.b16 %v1776, %v1774
    %v1853 = vpack.c.b16 %v1779, %v1777
    %v1854 = vpack.c.b16 %v1780, %v1778
    %v1855 = vpack.c.b16 %v1783, %v1781
    %v1856 = vpack.c.b16 %v1784, %v1782
    %v1857 = vpack.c.b16 %v1787, %v1785
    %v1858 = vpack.c.b16 %v1788, %v1786
    %v1859 = vpack.c.b16 %v1791, %v1789
    %v1860 = vpack.c.b16 %v1792, %v1790
    %v1861 = vpack.c.b16 %v1795, %v1793
    %v1862 = vpack.c.b16 %v1796, %v1794
    %v1863 = vpack.c.b16 %v1799, %v1797
    %v1864 = vpack.c.b16 %v1800, %v1798
    %1929 = vmatprep.subr.bf16.mxu0 %v1802
    %1930 = vmatpush1.bf16.msra.mxu0 %v1801
    %1931 = vmatprep.subr.bf16.mxu0 %v1804
    %1932 = vmatpush1.bf16.msra.mxu0 %v1803
    %1933 = vmatprep.subr.bf16.mxu0 %v1806
    %1934 = vmatpush1.bf16.msra.mxu0 %v1805
    %1935 = vmatprep.subr.bf16.mxu0 %v1808
    %1936 = vmatpush1.bf16.msra.mxu0 %v1807
    %1937 = vmatprep.subr.bf16.mxu0 %v1810
    %1938 = vmatpush1.bf16.msra.mxu0 %v1809
    %1939 = vmatprep.subr.bf16.mxu0 %v1812
    %1940 = vmatpush1.bf16.msra.mxu0 %v1811
    %1941 = vmatprep.subr.bf16.mxu0 %v1814
    %1942 = vmatpush1.bf16.msra.mxu0 %v1813
    %1943 = vmatprep.subr.bf16.mxu0 %v1816
    %1944 = vmatpush1.bf16.msra.mxu0 %v1815
    %1945 = vmatprep.subr.bf16.mxu0 %v1818
    %1946 = vmatpush1.bf16.msra.mxu0 %v1817
    %1947 = vmatprep.subr.bf16.mxu0 %v1820
    %1948 = vmatpush1.bf16.msra.mxu0 %v1819
    %1949 = vmatprep.subr.bf16.mxu0 %v1822
    %1950 = vmatpush1.bf16.msra.mxu0 %v1821
    %1951 = vmatprep.subr.bf16.mxu0 %v1824
    %1952 = vmatpush1.bf16.msra.mxu0 %v1823
    %1953 = vmatprep.subr.bf16.mxu0 %v1826
    %1954 = vmatpush1.bf16.msra.mxu0 %v1825
    %1955 = vmatprep.subr.bf16.mxu0 %v1828
    %1956 = vmatpush1.bf16.msra.mxu0 %v1827
    %1957 = vmatprep.subr.bf16.mxu0 %v1830
    %1958 = vmatpush1.bf16.msra.mxu0 %v1829
    %1959 = vmatprep.subr.bf16.mxu0 %v1832
    %1960 = vmatpush1.bf16.msra.mxu0 %v1831
    %1961 = vmatprep.mubr.bf16.mxu0 %v1530
    %1962 = vmatmul.mubr.bf16.gmra.mrb[0].mxu0 %v1529
    %v1963 = vpop.f32.mrb[0].mxu0
    %v1964 = vadd.f32 %v1602, %v1963
    %v1965 = vpop.f32.mrb[0].mxu0
    %v1966 = vadd.f32 %v1606, %v1965
    %v1967 = vpop.f32.mrb[0].mxu0
    %v1968 = vpop.f32.mrb[0].mxu0
    %1969 = vdwg.mxu0
    %1970 = vmatprep.subr.bf16.mxu0 %v1834
    %1971 = vmatpush1.bf16.msra.mxu0 %v1833
    %1972 = vmatprep.subr.bf16.mxu0 %v1836
    %1973 = vmatpush1.bf16.msra.mxu0 %v1835
    %1974 = vmatprep.subr.bf16.mxu0 %v1838
    %1975 = vmatpush1.bf16.msra.mxu0 %v1837
    %1976 = vmatprep.subr.bf16.mxu0 %v1840
    %1977 = vmatpush1.bf16.msra.mxu0 %v1839
    %1978 = vmatprep.subr.bf16.mxu0 %v1842
    %1979 = vmatpush1.bf16.msra.mxu0 %v1841
    %1980 = vmatprep.subr.bf16.mxu0 %v1844
    %1981 = vmatpush1.bf16.msra.mxu0 %v1843
    %1982 = vmatprep.subr.bf16.mxu0 %v1846
    %1983 = vmatpush1.bf16.msra.mxu0 %v1845
    %1984 = vmatprep.subr.bf16.mxu0 %v1848
    %1985 = vmatpush1.bf16.msra.mxu0 %v1847
    %1986 = vmatprep.subr.bf16.mxu0 %v1850
    %1987 = vmatpush1.bf16.msra.mxu0 %v1849
    %1988 = vmatprep.subr.bf16.mxu0 %v1852
    %1989 = vmatpush1.bf16.msra.mxu0 %v1851
    %1990 = vmatprep.subr.bf16.mxu0 %v1854
    %1991 = vmatpush1.bf16.msra.mxu0 %v1853
    %1992 = vmatprep.subr.bf16.mxu0 %v1856
    %1993 = vmatpush1.bf16.msra.mxu0 %v1855
    %1994 = vmatprep.subr.bf16.mxu0 %v1858
    %1995 = vmatpush1.bf16.msra.mxu0 %v1857
    %1996 = vmatprep.subr.bf16.mxu0 %v1860
    %1997 = vmatpush1.bf16.msra.mxu0 %v1859
    %1998 = vmatprep.subr.bf16.mxu0 %v1862
    %1999 = vmatpush1.bf16.msra.mxu0 %v1861
    %2000 = vmatprep.subr.bf16.mxu0 %v1864
    %2001 = vmatpush1.bf16.msra.mxu0 %v1863
    %2002 = vmatprep.mubr.bf16.mxu0 %v1532
    %2003 = vmatmul.mubr.bf16.gmra.mrb[0].mxu0 %v1531
    %v2004 = vpop.f32.mrb[0].mxu0
    %v2005 = vadd.f32 %v1964, %v2004
    %v2006 = vpop.f32.mrb[0].mxu0
    %v2007 = vadd.f32 %v1966, %v2006
    %v2008 = vpop.f32.mrb[0].mxu0
    %v2009 = vpop.f32.mrb[0].mxu0
    %2010 = vdwg.mxu0
    %v2011 = vmax.f32 %v2005, 0.0
    %v2012 = vmax.f32 %v2007, 0.0
    %v2013 = vpack.c.bf16 %v2011, %v2011
    %v2014 = vpack.c.bf16 %v2012, %v2012
    %v2015 = vld [vmem:[#allocation8] sm:$0xf]
    %v2016 = vld [vmem:[#allocation8 + $0x4] sm:$0xf]
    %v2017 = vld [vmem:[#allocation8 + $0x8] sm:$0xf]
    %v2018 = vld [vmem:[#allocation8 + $0xc] sm:$0xf]
    %v2019 = vld [vmem:[#allocation8 + $0x10] sm:$0xf]
    %v2020 = vld [vmem:[#allocation8 + $0x14] sm:$0xf]
    %v2021 = vld [vmem:[#allocation8 + $0x18] sm:$0xf]
    %v2022 = vld [vmem:[#allocation8 + $0x1c] sm:$0xf]
    %v2023 = vld [vmem:[#allocation8 + $0x20] sm:$0xf]
    %v2024 = vld [vmem:[#allocation8 + $0x24] sm:$0xf]
    %v2025 = vld [vmem:[#allocation8 + $0x28] sm:$0xf]
    %v2026 = vld [vmem:[#allocation8 + $0x2c] sm:$0xf]
    %v2027 = vld [vmem:[#allocation8 + $0x30] sm:$0xf]
    %v2028 = vld [vmem:[#allocation8 + $0x34] sm:$0xf]
    %v2029 = vld [vmem:[#allocation8 + $0x38] sm:$0xf]
    %v2030 = vld [vmem:[#allocation8 + $0x3c] sm:$0xf]
    %v2031 = vld [vmem:[#allocation8 + $0x40] sm:$0xf]
    %v2032 = vld [vmem:[#allocation8 + $0x44] sm:$0xf]
    %v2033 = vld [vmem:[#allocation8 + $0x48] sm:$0xf]
    %v2034 = vld [vmem:[#allocation8 + $0x4c] sm:$0xf]
    %v2035 = vld [vmem:[#allocation8 + $0x50] sm:$0xf]
    %v2036 = vld [vmem:[#allocation8 + $0x54] sm:$0xf]
    %v2037 = vld [vmem:[#allocation8 + $0x58] sm:$0xf]
    %v2038 = vld [vmem:[#allocation8 + $0x5c] sm:$0xf]
    %v2039 = vld [vmem:[#allocation8 + $0x60] sm:$0xf]
    %v2040 = vld [vmem:[#allocation8 + $0x64] sm:$0xf]
    %v2041 = vld [vmem:[#allocation8 + $0x68] sm:$0xf]
    %v2042 = vld [vmem:[#allocation8 + $0x6c] sm:$0xf]
    %v2043 = vld [vmem:[#allocation8 + $0x70] sm:$0xf]
    %v2044 = vld [vmem:[#allocation8 + $0x74] sm:$0xf]
    %v2045 = vld [vmem:[#allocation8 + $0x78] sm:$0xf]
    %v2046 = vld [vmem:[#allocation8 + $0x7c] sm:$0xf]
    %v2047 = vld [vmem:[%s6] sm:$0x1]
    %v2049 = vlaneseq
    %v2050 = vshrl.u32 %v2049, 7
    %v2051 = vsub.s32 0, %v2050
    %v2052 = vrot.slane %v2047, %v2051
    %v2086 = vunpack.c.l.b16 %v2015
    %v2087 = vunpack.c.l.b16 %v2016
    %v2088 = vunpack.c.l.b16 %v2017
    %v2089 = vunpack.c.l.b16 %v2018
    %v2090 = vunpack.c.l.b16 %v2019
    %v2091 = vunpack.c.l.b16 %v2020
    %v2092 = vunpack.c.l.b16 %v2021
    %v2093 = vunpack.c.l.b16 %v2022
    %v2094 = vunpack.c.l.b16 %v2023
    %v2095 = vunpack.c.l.b16 %v2024
    %v2096 = vunpack.c.l.b16 %v2025
    %v2097 = vunpack.c.l.b16 %v2026
    %v2098 = vunpack.c.l.b16 %v2027
    %v2099 = vunpack.c.l.b16 %v2028
    %v2100 = vunpack.c.l.b16 %v2029
    %v2101 = vunpack.c.l.b16 %v2030
    %v2102 = vunpack.c.l.b16 %v2031
    %v2103 = vunpack.c.l.b16 %v2032
    %v2104 = vunpack.c.l.b16 %v2033
    %v2105 = vunpack.c.l.b16 %v2034
    %v2106 = vunpack.c.l.b16 %v2035
    %v2107 = vunpack.c.l.b16 %v2036
    %v2108 = vunpack.c.l.b16 %v2037
    %v2109 = vunpack.c.l.b16 %v2038
    %v2110 = vunpack.c.l.b16 %v2039
    %v2111 = vunpack.c.l.b16 %v2040
    %v2112 = vunpack.c.l.b16 %v2041
    %v2113 = vunpack.c.l.b16 %v2042
    %v2114 = vunpack.c.l.b16 %v2043
    %v2115 = vunpack.c.l.b16 %v2044
    %v2116 = vunpack.c.l.b16 %v2045
    %v2117 = vunpack.c.l.b16 %v2046
    %v2118 = vpack.c.b16 %v2087, %v2086
    %v2119 = vpack.c.b16 %v2089, %v2088
    %v2120 = vpack.c.b16 %v2091, %v2090
    %v2121 = vpack.c.b16 %v2093, %v2092
    %v2122 = vpack.c.b16 %v2095, %v2094
    %v2123 = vpack.c.b16 %v2097, %v2096
    %v2124 = vpack.c.b16 %v2099, %v2098
    %v2125 = vpack.c.b16 %v2101, %v2100
    %v2126 = vpack.c.b16 %v2103, %v2102
    %v2127 = vpack.c.b16 %v2105, %v2104
    %v2128 = vpack.c.b16 %v2107, %v2106
    %v2129 = vpack.c.b16 %v2109, %v2108
    %v2130 = vpack.c.b16 %v2111, %v2110
    %v2131 = vpack.c.b16 %v2113, %v2112
    %v2132 = vpack.c.b16 %v2115, %v2114
    %v2133 = vpack.c.b16 %v2117, %v2116
    %2150 = vmatprep.subr.bf16.mxu0 0
    %2151 = vmatpush1.bf16.msra.mxu0 %v2118
    %2152 = vmatprep.subr.bf16.mxu0 0
    %2153 = vmatpush1.bf16.msra.mxu0 %v2119
    %2154 = vmatprep.subr.bf16.mxu0 0
    %2155 = vmatpush1.bf16.msra.mxu0 %v2120
    %2156 = vmatprep.subr.bf16.mxu0 0
    %2157 = vmatpush1.bf16.msra.mxu0 %v2121
    %2158 = vmatprep.subr.bf16.mxu0 0
    %2159 = vmatpush1.bf16.msra.mxu0 %v2122
    %2160 = vmatprep.subr.bf16.mxu0 0
    %2161 = vmatpush1.bf16.msra.mxu0 %v2123
    %2162 = vmatprep.subr.bf16.mxu0 0
    %2163 = vmatpush1.bf16.msra.mxu0 %v2124
    %2164 = vmatprep.subr.bf16.mxu0 0
    %2165 = vmatpush1.bf16.msra.mxu0 %v2125
    %2166 = vmatprep.subr.bf16.mxu0 0
    %2167 = vmatpush1.bf16.msra.mxu0 %v2126
    %2168 = vmatprep.subr.bf16.mxu0 0
    %2169 = vmatpush1.bf16.msra.mxu0 %v2127
    %2170 = vmatprep.subr.bf16.mxu0 0
    %2171 = vmatpush1.bf16.msra.mxu0 %v2128
    %2172 = vmatprep.subr.bf16.mxu0 0
    %2173 = vmatpush1.bf16.msra.mxu0 %v2129
    %2174 = vmatprep.subr.bf16.mxu0 0
    %2175 = vmatpush1.bf16.msra.mxu0 %v2130
    %2176 = vmatprep.subr.bf16.mxu0 0
    %2177 = vmatpush1.bf16.msra.mxu0 %v2131
    %2178 = vmatprep.subr.bf16.mxu0 0
    %2179 = vmatpush1.bf16.msra.mxu0 %v2132
    %2180 = vmatprep.subr.bf16.mxu0 0
    %2181 = vmatpush1.bf16.msra.mxu0 %v2133
    %2182 = vmatprep.mubr.bf16.mxu0 %v2014
    %2183 = vmatmul.mubr.bf16.gmra.mrb[0].mxu0 %v2013
    %v2184 = vpop.f32.mrb[0].mxu0
    %v2185 = vadd.f32 %v2052, %v2184
    %v2186 = vpop.f32.mrb[0].mxu0
    %v2187 = vpop.f32.mrb[0].mxu0
    %v2188 = vpop.f32.mrb[0].mxu0
    %2189 = vdwg.mxu0
    %2190 = vmax.xlane.f32.xlu0 %v2185
    %v2191 = vpop.xlane.xlu0 %2190
    %v2192 = vsub.f32 %v2185, %v2191
    %v2193 = vmul.f32 %v2192, 1.442695
    %v2194 = vpow.pop %v2193
    %2195 = vadd.xlane.f32.xlu0 %v2194
    %v2196 = vpop.xlane.xlu0 %2195
    %v2197 = vlog2.pop %v2196
    %v2198 = vmul.f32 %v2197, 0.6931472
    %v2199 = vsub.f32 %v2192, %v2198
    %2200 = vst [vmem:[#allocation10] sm:$0xff] %v2199
    // Predicated region
    $region46: #{tpu_custom_call.1} parent=1 // pred_check
      _
    $region47: #{tpu_custom_call.1} parent=1 // pred_check_branch
      %2202 = sbr.rel (0) target = $region49
    $region48: #{tpu_custom_call.1} parent=1 // pred_region
      %s2204 = ssub.s32 128, 128
      %2205 = vsyncadd [#allocation4], %s2204
      %s2207 = sshll.u32 [#allocation10], 4
      %s2208 = int_to_ptr.vmem [resolvable:$true] %s2207
      %2210 = dma.vmem_to_hbm [thread:$0]  %s2208, 128, %s7, [#allocation4]
    $region49: #{tpu_custom_call.1} parent=1 // pred_fallthru
      _
    // Predicated region
    $region50: #{tpu_custom_call.1} parent=1 // pred_check
      _
    $region51: #{tpu_custom_call.1} parent=1 // pred_check_branch
      %2212 = sbr.rel (0) target = $region53
    $region52: #{tpu_custom_call.1} parent=1 // pred_region
      %2213 = dma.done [#allocation4], 128
    $region53: #{tpu_custom_call.1} parent=1 // pred_fallthru
      _
    %2214 = vsyncpa [#allocation3], 1
    %2215 = vsyncpa [#allocation6], 1
    %2216 = vsyncpa [#allocation9], 1
    %2217 = vsyncpa [#allocation4], 1

</llo_original>
